<compile_context>
chip_gen: v7x
topology: tpu7x:2x2x1
jax: 0.10.0
libtpu: 0.0.40
codegen_flags: <defaults>
</compile_context>

<pallas_src>
import jax
import jax.numpy as jnp
from jax import lax
from jax.experimental import pallas as pl
from jax.experimental.pallas import tpu as pltpu

# ----- problem configuration -----
N, C, H, W = 2, 8, 16, 16      # batch, in_feat, spatial
INNER = 16                     # inner_feat
K = 3                          # depthwise kernel size
PAD = 4                        # reflection pad
GROUPS = 4                     # channel shuffle groups
EPS = 1e-5

HP, WP = H + 2 * PAD, W + 2 * PAD          # padded spatial (24, 24)
assert H + 2 * PAD - (K - 1) - K * (K - 1) == H   # spatial-size invariant

SPAD = HP * WP                              # flat padded grid (576)
SOUT = 640                                  # 5*128, lane-dense flat output width
MAXS2 = K * ((K - 1) * WP + (K - 1))        # max dilated-tap flat shift (150)
MAXS1 = (K - 1) * WP + (K - 1)              # max 3x3-tap flat shift (50)
WTAP = 896                                  # 7*128 >= SOUT + MAXS2 (790)
WSRC = WTAP + MAXS1                         # padded flat source width (946)

# packed-parameter slab row layout (sublane-tile aligned sections)
ROW_DW = 0    # rows 0:C   cols [w_dw(9) | b_dw(1) | w_dwd(9) | b_dwd(1)]
ROW_LN = 8    # rows 8,9,10 = gamma, beta, mask (width SOUT)
ROW_W1 = 16   # rows 16:16+INNER, cols 0:C = w1, col C = b1
ROW_W2 = 32   # rows 32:32+C,     cols 0:INNER = w2, col INNER = b2
P_ROWS = 40

_INV_SQRT2 = 0.7071067811865476


def resblock_kernel(taps_ref, p_ref, res_ref, out_ref):
    # ---- depthwise 3x3: taps pre-shifted by the wrapper -> aligned slab FMAs ----
    w_dw = p_ref[ROW_DW:ROW_DW + C, 0:K * K]                    # (C, 9)
    b_dw = p_ref[ROW_DW:ROW_DW + C, K * K:K * K + 1]            # (C, 1)
    acc = taps_ref[0] * w_dw[None, :, 0:1]
    for t in range(1, K * K):
        acc = acc + taps_ref[t] * w_dw[None, :, t:t + 1]
    acc = acc + b_dw[None, :, :]                                # (N, C, WTAP)

    # ---- depthwise 3x3 conv, dilation=3: 9 lane-offset value slices of acc ----
    w_dwd = p_ref[ROW_DW:ROW_DW + C, K * K + 1:2 * K * K + 1]   # (C, 9)
    b_dwd = p_ref[ROW_DW:ROW_DW + C, 2 * K * K + 1:2 * K * K + 2]
    acc2 = None
    t = 0
    for dy in range(K):
        for dx in range(K):
            s = K * (dy * WP + dx)
            tap = w_dwd[None, :, t:t + 1] * acc[:, :, s:s + SOUT]
            acc2 = tap if acc2 is None else acc2 + tap
            t += 1
    acc2 = acc2 + b_dwd[None, :, :]                             # (N, C, SOUT)

    # ---- LayerNorm over the 256 valid positions (masked), lane-dense ----
    # mask is 0/1 from finite zero padding -> plain multiply is safe here.
    mask = p_ref[ROW_LN + 2:ROW_LN + 3, :]                      # (1, SOUT)
    inv_n = 1.0 / float(H * W)
    mu = jnp.sum(acc2 * mask[None], axis=-1, keepdims=True) * inv_n
    cen = acc2 - mu
    var = jnp.sum((cen * mask[None]) ** 2, axis=-1, keepdims=True) * inv_n
    gamma = p_ref[ROW_LN:ROW_LN + 1, :]                         # zero off-grid
    beta = p_ref[ROW_LN + 1:ROW_LN + 2, :]
    xn = cen * lax.rsqrt(var + EPS) * gamma[None] + beta[None]  # 0 at invalid lanes

    # ---- 1x1 convs on the MXU: batch folded along lanes (128-aligned concat) ----
    z = jnp.concatenate([xn[n] for n in range(N)], axis=-1)     # (C, N*SOUT)
    w1 = p_ref[ROW_W1:ROW_W1 + INNER, 0:C]                      # (INNER, C)
    b1 = p_ref[ROW_W1:ROW_W1 + INNER, C:C + 1]                  # (INNER, 1)
    h = jnp.dot(w1, z, preferred_element_type=jnp.float32) + b1
    # exact (erf) GELU, matching torch.nn.GELU() default
    h = 0.5 * h * (1.0 + lax.erf(h * _INV_SQRT2))
    w2 = p_ref[ROW_W2:ROW_W2 + C, 0:INNER]                      # (C, INNER)
    b2 = p_ref[ROW_W2:ROW_W2 + C, INNER:INNER + 1]              # (C, 1)
    o = jnp.dot(w2, h, preferred_element_type=jnp.float32) + b2
    out_ref[...] = (o + res_ref[...]).astype(out_ref.dtype)     # dense 1280-wide store


def resblock_forward(x, params):
    # TODO(synk): stride != 1 path (F.interpolate scale_factor=0.5 on the residual
    # + strided conv2) not implemented; this build uses stride == 1.

    # ---- fold the channel shuffle into the weights (trace-time, zero kernel cost)
    perm = [(c % GROUPS) * (C // GROUPS) + c // GROUPS for c in range(C)]
    inv_perm = [0] * C
    for c, j in enumerate(perm):
        inv_perm[j] = c
    inv_perm = jnp.asarray(inv_perm)
    w_dw = params["w_dw"].reshape(C, K * K)[inv_perm]
    b_dw = params["b_dw"].reshape(C, 1)[inv_perm]
    w_dwd = params["w_dwd"].reshape(C, K * K)[inv_perm]
    b_dwd = params["b_dwd"].reshape(C, 1)[inv_perm]
    w1 = params["w1"][:, inv_perm]

    # ---- reflection pad, flatten spatial with row stride WP, pre-shift conv1 taps
    xp = jnp.pad(x, ((0, 0), (0, 0), (PAD, PAD), (PAD, PAD)), mode="reflect")
    xflat = jnp.pad(xp.reshape(N, C, SPAD), ((0, 0), (0, 0), (0, WSRC - SPAD)))
    shifts = [ky * WP + kx for ky in range(K) for kx in range(K)]
    taps = jnp.stack([xflat[:, :, s:s + WTAP] for s in shifts], axis=0)  # (9,N,C,WTAP)

    # ---- residual pre-scattered into the (C, N*SOUT) flat output layout ----
    res = jnp.pad(x, ((0, 0), (0, 0), (0, HP - H), (0, WP - W))).reshape(N, C, SPAD)
    res = jnp.pad(res, ((0, 0), (0, 0), (0, SOUT - SPAD)))
    res_cat = jnp.transpose(res, (1, 0, 2)).reshape(C, N * SOUT)

    # ---- single packed parameter slab (P_ROWS, SOUT) ----
    p = jnp.zeros((P_ROWS, SOUT), jnp.float32)
    dwp = jnp.concatenate([w_dw, b_dw, w_dwd, b_dwd], axis=1)            # (C, 20)
    p = p.at[ROW_DW:ROW_DW + C, 0:2 * K * K + 2].set(dwp)
    pad2 = ((0, HP - H), (0, WP - W))
    gamma_f = jnp.pad(jnp.pad(params["gamma"], pad2).reshape(SPAD), (0, SOUT - SPAD))
    beta_f = jnp.pad(jnp.pad(params["beta"], pad2).reshape(SPAD), (0, SOUT - SPAD))
    mask_f = jnp.pad(jnp.pad(jnp.ones((H, W), jnp.float32), pad2).reshape(SPAD),
                     (0, SOUT - SPAD))
    p = p.at[ROW_LN + 0].set(gamma_f)
    p = p.at[ROW_LN + 1].set(beta_f)
    p = p.at[ROW_LN + 2].set(mask_f)
    p = p.at[ROW_W1:ROW_W1 + INNER, 0:C].set(w1)
    p = p.at[ROW_W1:ROW_W1 + INNER, C:C + 1].set(params["b1"])
    p = p.at[ROW_W2:ROW_W2 + C, 0:INNER].set(params["w2"])
    p = p.at[ROW_W2:ROW_W2 + C, INNER:INNER + 1].set(params["b2"])

    vmem = pl.BlockSpec(memory_space=pltpu.MemorySpace.VMEM)
    out_cat = pl.pallas_call(
        resblock_kernel,
        out_shape=jax.ShapeDtypeStruct((C, N * SOUT), x.dtype),
        in_specs=[vmem, vmem, vmem],
        out_specs=vmem,
    )(taps, p, res_cat)

    # crop the valid 16x16 region back out of the flat 24-stride layout
    out = jnp.transpose(out_cat.reshape(C, N, SOUT), (1, 0, 2))[:, :, :SPAD]
    return out.reshape(N, C, HP, WP)[:, :, :H, :W]


def ref_forward(x, params):
    """Pure-JAX reference mirroring the PyTorch forward (stride=1)."""
    res = x
    xp = jnp.pad(x, ((0, 0), (0, 0), (PAD, PAD), (PAD, PAD)), mode="reflect")
    xs = (xp.reshape(N, GROUPS, C // GROUPS, HP, WP)
            .transpose(0, 2, 1, 3, 4)
            .reshape(N, C, HP, WP))
    dn = ("NCHW", "OIHW", "NCHW")
    y = lax.conv_general_dilated(xs, params["w_dw"].reshape(C, 1, K, K), (1, 1),
                                 "VALID", feature_group_count=C,
                                 dimension_numbers=dn)
    y = y + params["b_dw"].reshape(1, C, 1, 1)
    y = lax.conv_general_dilated(y, params["w_dwd"].reshape(C, 1, K, K), (1, 1),
                                 "VALID", rhs_dilation=(K, K),
                                 feature_group_count=C, dimension_numbers=dn)
    y = y + params["b_dwd"].reshape(1, C, 1, 1)
    mu = y.mean(axis=(2, 3), keepdims=True)
    var = ((y - mu) ** 2).mean(axis=(2, 3), keepdims=True)
    y = (y - mu) / jnp.sqrt(var + EPS) * params["gamma"][None, None] + params["beta"][None, None]
    z = jnp.einsum("oc,nchw->nohw", params["w1"], y) + params["b1"].reshape(1, INNER, 1, 1)
    z = jax.nn.gelu(z, approximate=False)
    z = jnp.einsum("oc,nchw->nohw", params["w2"], z) + params["b2"].reshape(1, C, 1, 1)
    return z + res


if __name__ == "__main__":
    key = jax.random.PRNGKey(0)
    ks = jax.random.split(key, 10)
    x = jax.random.normal(ks[0], (N, C, H, W), jnp.float32)

    params = {
        "w_dw":  0.3 * jax.random.normal(ks[1], (C, K, K), jnp.float32),
        "b_dw":  0.1 * jax.random.normal(ks[2], (C, 1, 1), jnp.float32),
        "w_dwd": 0.3 * jax.random.normal(ks[3], (C, K, K), jnp.float32),
        "b_dwd": 0.1 * jax.random.normal(ks[4], (C, 1, 1), jnp.float32),
        "gamma": jnp.ones((H, W), jnp.float32),    # nn.LayerNorm default init
        "beta":  jnp.zeros((H, W), jnp.float32),
        "w1":    0.3 * jax.random.normal(ks[5], (INNER, C), jnp.float32),
        "b1":    0.1 * jax.random.normal(ks[6], (INNER, 1), jnp.float32),
        "w2":    0.3 * jax.random.normal(ks[7], (C, INNER), jnp.float32),
        "b2":    0.1 * jax.random.normal(ks[8], (C, 1), jnp.float32),
    }

    out = jax.block_until_ready(resblock_forward(x, params))
    ref = jax.block_until_ready(ref_forward(x, params))

    assert out.shape == (N, C, H, W), out.shape
    if not jnp.allclose(out, ref, atol=2e-3, rtol=2e-3):
        raise AssertionError(
            f"mismatch vs reference: max abs err = {float(jnp.max(jnp.abs(out - ref)))}")
    print("KERNEL_OK")
</pallas_src>

<mosaic_0001>
module attributes {stable_mosaic.version = 11 : i64} {
  func.func @resblock_kernel(%arg0: memref<9x2x8x896xf32, #tpu.memory_space<vmem>>, %arg1: memref<40x640xf32, #tpu.memory_space<vmem>>, %arg2: memref<8x1280xf32, #tpu.memory_space<vmem>>, %arg3: memref<8x1280xf32, #tpu.memory_space<vmem>>) attributes {dimension_semantics = [], scalar_prefetch = 0 : i64, scratch_operands = 0 : i64, tpu.core_type = #tpu.core_type<tc>} {
    %c0 = arith.constant 0 : index
    %c0_0 = arith.constant 0 : index
    %0 = vector.load %arg1[%c0, %c0_0] : memref<40x640xf32, #tpu.memory_space<vmem>>, vector<8x9xf32>
    %c0_1 = arith.constant 0 : index
    %c9 = arith.constant 9 : index
    %1 = vector.load %arg1[%c0_1, %c9] : memref<40x640xf32, #tpu.memory_space<vmem>>, vector<8x1xf32>
    %c0_2 = arith.constant 0 : index
    %c0_3 = arith.constant 0 : index
    %c0_4 = arith.constant 0 : index
    %c0_5 = arith.constant 0 : index
    %2 = vector.load %arg0[%c0_2, %c0_3, %c0_4, %c0_5] : memref<9x2x8x896xf32, #tpu.memory_space<vmem>>, vector<1x2x8x896xf32>
    %3 = vector.shape_cast %2 : vector<1x2x8x896xf32> to vector<2x8x896xf32>
    %4 = vector.extract_strided_slice %0 {offsets = [0, 0], sizes = [8, 1], strides = [1, 1]} : vector<8x9xf32> to vector<8x1xf32>
    %5 = vector.shape_cast %4 : vector<8x1xf32> to vector<1x8x1xf32>
    %6 = vector.broadcast %5 : vector<1x8x1xf32> to vector<2x8x896xf32>
    %7 = arith.mulf %3, %6 : vector<2x8x896xf32>
    %c1 = arith.constant 1 : index
    %c0_6 = arith.constant 0 : index
    %c0_7 = arith.constant 0 : index
    %c0_8 = arith.constant 0 : index
    %8 = vector.load %arg0[%c1, %c0_6, %c0_7, %c0_8] : memref<9x2x8x896xf32, #tpu.memory_space<vmem>>, vector<1x2x8x896xf32>
    %9 = vector.shape_cast %8 : vector<1x2x8x896xf32> to vector<2x8x896xf32>
    %10 = vector.extract_strided_slice %0 {offsets = [0, 1], sizes = [8, 1], strides = [1, 1]} : vector<8x9xf32> to vector<8x1xf32>
    %11 = vector.shape_cast %10 : vector<8x1xf32> to vector<1x8x1xf32>
    %12 = vector.broadcast %11 : vector<1x8x1xf32> to vector<2x8x896xf32>
    %13 = arith.mulf %9, %12 : vector<2x8x896xf32>
    %14 = arith.addf %7, %13 : vector<2x8x896xf32>
    %c2 = arith.constant 2 : index
    %c0_9 = arith.constant 0 : index
    %c0_10 = arith.constant 0 : index
    %c0_11 = arith.constant 0 : index
    %15 = vector.load %arg0[%c2, %c0_9, %c0_10, %c0_11] : memref<9x2x8x896xf32, #tpu.memory_space<vmem>>, vector<1x2x8x896xf32>
    %16 = vector.shape_cast %15 : vector<1x2x8x896xf32> to vector<2x8x896xf32>
    %17 = vector.extract_strided_slice %0 {offsets = [0, 2], sizes = [8, 1], strides = [1, 1]} : vector<8x9xf32> to vector<8x1xf32>
    %18 = vector.shape_cast %17 : vector<8x1xf32> to vector<1x8x1xf32>
    %19 = vector.broadcast %18 : vector<1x8x1xf32> to vector<2x8x896xf32>
    %20 = arith.mulf %16, %19 : vector<2x8x896xf32>
    %21 = arith.addf %14, %20 : vector<2x8x896xf32>
    %c3 = arith.constant 3 : index
    %c0_12 = arith.constant 0 : index
    %c0_13 = arith.constant 0 : index
    %c0_14 = arith.constant 0 : index
    %22 = vector.load %arg0[%c3, %c0_12, %c0_13, %c0_14] : memref<9x2x8x896xf32, #tpu.memory_space<vmem>>, vector<1x2x8x896xf32>
    %23 = vector.shape_cast %22 : vector<1x2x8x896xf32> to vector<2x8x896xf32>
    %24 = vector.extract_strided_slice %0 {offsets = [0, 3], sizes = [8, 1], strides = [1, 1]} : vector<8x9xf32> to vector<8x1xf32>
    %25 = vector.shape_cast %24 : vector<8x1xf32> to vector<1x8x1xf32>
    %26 = vector.broadcast %25 : vector<1x8x1xf32> to vector<2x8x896xf32>
    %27 = arith.mulf %23, %26 : vector<2x8x896xf32>
    %28 = arith.addf %21, %27 : vector<2x8x896xf32>
    %c4 = arith.constant 4 : index
    %c0_15 = arith.constant 0 : index
    %c0_16 = arith.constant 0 : index
    %c0_17 = arith.constant 0 : index
    %29 = vector.load %arg0[%c4, %c0_15, %c0_16, %c0_17] : memref<9x2x8x896xf32, #tpu.memory_space<vmem>>, vector<1x2x8x896xf32>
    %30 = vector.shape_cast %29 : vector<1x2x8x896xf32> to vector<2x8x896xf32>
    %31 = vector.extract_strided_slice %0 {offsets = [0, 4], sizes = [8, 1], strides = [1, 1]} : vector<8x9xf32> to vector<8x1xf32>
    %32 = vector.shape_cast %31 : vector<8x1xf32> to vector<1x8x1xf32>
    %33 = vector.broadcast %32 : vector<1x8x1xf32> to vector<2x8x896xf32>
    %34 = arith.mulf %30, %33 : vector<2x8x896xf32>
    %35 = arith.addf %28, %34 : vector<2x8x896xf32>
    %c5 = arith.constant 5 : index
    %c0_18 = arith.constant 0 : index
    %c0_19 = arith.constant 0 : index
    %c0_20 = arith.constant 0 : index
    %36 = vector.load %arg0[%c5, %c0_18, %c0_19, %c0_20] : memref<9x2x8x896xf32, #tpu.memory_space<vmem>>, vector<1x2x8x896xf32>
    %37 = vector.shape_cast %36 : vector<1x2x8x896xf32> to vector<2x8x896xf32>
    %38 = vector.extract_strided_slice %0 {offsets = [0, 5], sizes = [8, 1], strides = [1, 1]} : vector<8x9xf32> to vector<8x1xf32>
    %39 = vector.shape_cast %38 : vector<8x1xf32> to vector<1x8x1xf32>
    %40 = vector.broadcast %39 : vector<1x8x1xf32> to vector<2x8x896xf32>
    %41 = arith.mulf %37, %40 : vector<2x8x896xf32>
    %42 = arith.addf %35, %41 : vector<2x8x896xf32>
    %c6 = arith.constant 6 : index
    %c0_21 = arith.constant 0 : index
    %c0_22 = arith.constant 0 : index
    %c0_23 = arith.constant 0 : index
    %43 = vector.load %arg0[%c6, %c0_21, %c0_22, %c0_23] : memref<9x2x8x896xf32, #tpu.memory_space<vmem>>, vector<1x2x8x896xf32>
    %44 = vector.shape_cast %43 : vector<1x2x8x896xf32> to vector<2x8x896xf32>
    %45 = vector.extract_strided_slice %0 {offsets = [0, 6], sizes = [8, 1], strides = [1, 1]} : vector<8x9xf32> to vector<8x1xf32>
    %46 = vector.shape_cast %45 : vector<8x1xf32> to vector<1x8x1xf32>
    %47 = vector.broadcast %46 : vector<1x8x1xf32> to vector<2x8x896xf32>
    %48 = arith.mulf %44, %47 : vector<2x8x896xf32>
    %49 = arith.addf %42, %48 : vector<2x8x896xf32>
    %c7 = arith.constant 7 : index
    %c0_24 = arith.constant 0 : index
    %c0_25 = arith.constant 0 : index
    %c0_26 = arith.constant 0 : index
    %50 = vector.load %arg0[%c7, %c0_24, %c0_25, %c0_26] : memref<9x2x8x896xf32, #tpu.memory_space<vmem>>, vector<1x2x8x896xf32>
    %51 = vector.shape_cast %50 : vector<1x2x8x896xf32> to vector<2x8x896xf32>
    %52 = vector.extract_strided_slice %0 {offsets = [0, 7], sizes = [8, 1], strides = [1, 1]} : vector<8x9xf32> to vector<8x1xf32>
    %53 = vector.shape_cast %52 : vector<8x1xf32> to vector<1x8x1xf32>
    %54 = vector.broadcast %53 : vector<1x8x1xf32> to vector<2x8x896xf32>
    %55 = arith.mulf %51, %54 : vector<2x8x896xf32>
    %56 = arith.addf %49, %55 : vector<2x8x896xf32>
    %c8 = arith.constant 8 : index
    %c0_27 = arith.constant 0 : index
    %c0_28 = arith.constant 0 : index
    %c0_29 = arith.constant 0 : index
    %57 = vector.load %arg0[%c8, %c0_27, %c0_28, %c0_29] : memref<9x2x8x896xf32, #tpu.memory_space<vmem>>, vector<1x2x8x896xf32>
    %58 = vector.shape_cast %57 : vector<1x2x8x896xf32> to vector<2x8x896xf32>
    %59 = vector.extract_strided_slice %0 {offsets = [0, 8], sizes = [8, 1], strides = [1, 1]} : vector<8x9xf32> to vector<8x1xf32>
    %60 = vector.shape_cast %59 : vector<8x1xf32> to vector<1x8x1xf32>
    %61 = vector.broadcast %60 : vector<1x8x1xf32> to vector<2x8x896xf32>
    %62 = arith.mulf %58, %61 : vector<2x8x896xf32>
    %63 = arith.addf %56, %62 : vector<2x8x896xf32>
    %64 = vector.shape_cast %1 : vector<8x1xf32> to vector<1x8x1xf32>
    %65 = vector.broadcast %64 : vector<1x8x1xf32> to vector<2x8x896xf32>
    %66 = arith.addf %63, %65 : vector<2x8x896xf32>
    %c0_30 = arith.constant 0 : index
    %c10 = arith.constant 10 : index
    %67 = vector.load %arg1[%c0_30, %c10] : memref<40x640xf32, #tpu.memory_space<vmem>>, vector<8x9xf32>
    %c0_31 = arith.constant 0 : index
    %c19 = arith.constant 19 : index
    %68 = vector.load %arg1[%c0_31, %c19] : memref<40x640xf32, #tpu.memory_space<vmem>>, vector<8x1xf32>
    %69 = vector.extract_strided_slice %67 {offsets = [0, 0], sizes = [8, 1], strides = [1, 1]} : vector<8x9xf32> to vector<8x1xf32>
    %70 = vector.shape_cast %69 : vector<8x1xf32> to vector<1x8x1xf32>
    %71 = vector.extract_strided_slice %66 {offsets = [0, 0, 0], sizes = [2, 8, 640], strides = [1, 1, 1]} : vector<2x8x896xf32> to vector<2x8x640xf32>
    %72 = vector.broadcast %70 : vector<1x8x1xf32> to vector<2x8x640xf32>
    %73 = arith.mulf %72, %71 : vector<2x8x640xf32>
    %74 = vector.extract_strided_slice %67 {offsets = [0, 1], sizes = [8, 1], strides = [1, 1]} : vector<8x9xf32> to vector<8x1xf32>
    %75 = vector.shape_cast %74 : vector<8x1xf32> to vector<1x8x1xf32>
    %76 = vector.extract_strided_slice %66 {offsets = [0, 0, 3], sizes = [2, 8, 640], strides = [1, 1, 1]} : vector<2x8x896xf32> to vector<2x8x640xf32>
    %77 = vector.broadcast %75 : vector<1x8x1xf32> to vector<2x8x640xf32>
    %78 = arith.mulf %77, %76 : vector<2x8x640xf32>
    %79 = arith.addf %73, %78 : vector<2x8x640xf32>
    %80 = vector.extract_strided_slice %67 {offsets = [0, 2], sizes = [8, 1], strides = [1, 1]} : vector<8x9xf32> to vector<8x1xf32>
    %81 = vector.shape_cast %80 : vector<8x1xf32> to vector<1x8x1xf32>
    %82 = vector.extract_strided_slice %66 {offsets = [0, 0, 6], sizes = [2, 8, 640], strides = [1, 1, 1]} : vector<2x8x896xf32> to vector<2x8x640xf32>
    %83 = vector.broadcast %81 : vector<1x8x1xf32> to vector<2x8x640xf32>
    %84 = arith.mulf %83, %82 : vector<2x8x640xf32>
    %85 = arith.addf %79, %84 : vector<2x8x640xf32>
    %86 = vector.extract_strided_slice %67 {offsets = [0, 3], sizes = [8, 1], strides = [1, 1]} : vector<8x9xf32> to vector<8x1xf32>
    %87 = vector.shape_cast %86 : vector<8x1xf32> to vector<1x8x1xf32>
    %88 = vector.extract_strided_slice %66 {offsets = [0, 0, 72], sizes = [2, 8, 640], strides = [1, 1, 1]} : vector<2x8x896xf32> to vector<2x8x640xf32>
    %89 = vector.broadcast %87 : vector<1x8x1xf32> to vector<2x8x640xf32>
    %90 = arith.mulf %89, %88 : vector<2x8x640xf32>
    %91 = arith.addf %85, %90 : vector<2x8x640xf32>
    %92 = vector.extract_strided_slice %67 {offsets = [0, 4], sizes = [8, 1], strides = [1, 1]} : vector<8x9xf32> to vector<8x1xf32>
    %93 = vector.shape_cast %92 : vector<8x1xf32> to vector<1x8x1xf32>
    %94 = vector.extract_strided_slice %66 {offsets = [0, 0, 75], sizes = [2, 8, 640], strides = [1, 1, 1]} : vector<2x8x896xf32> to vector<2x8x640xf32>
    %95 = vector.broadcast %93 : vector<1x8x1xf32> to vector<2x8x640xf32>
    %96 = arith.mulf %95, %94 : vector<2x8x640xf32>
    %97 = arith.addf %91, %96 : vector<2x8x640xf32>
    %98 = vector.extract_strided_slice %67 {offsets = [0, 5], sizes = [8, 1], strides = [1, 1]} : vector<8x9xf32> to vector<8x1xf32>
    %99 = vector.shape_cast %98 : vector<8x1xf32> to vector<1x8x1xf32>
    %100 = vector.extract_strided_slice %66 {offsets = [0, 0, 78], sizes = [2, 8, 640], strides = [1, 1, 1]} : vector<2x8x896xf32> to vector<2x8x640xf32>
    %101 = vector.broadcast %99 : vector<1x8x1xf32> to vector<2x8x640xf32>
    %102 = arith.mulf %101, %100 : vector<2x8x640xf32>
    %103 = arith.addf %97, %102 : vector<2x8x640xf32>
    %104 = vector.extract_strided_slice %67 {offsets = [0, 6], sizes = [8, 1], strides = [1, 1]} : vector<8x9xf32> to vector<8x1xf32>
    %105 = vector.shape_cast %104 : vector<8x1xf32> to vector<1x8x1xf32>
    %106 = vector.extract_strided_slice %66 {offsets = [0, 0, 144], sizes = [2, 8, 640], strides = [1, 1, 1]} : vector<2x8x896xf32> to vector<2x8x640xf32>
    %107 = vector.broadcast %105 : vector<1x8x1xf32> to vector<2x8x640xf32>
    %108 = arith.mulf %107, %106 : vector<2x8x640xf32>
    %109 = arith.addf %103, %108 : vector<2x8x640xf32>
    %110 = vector.extract_strided_slice %67 {offsets = [0, 7], sizes = [8, 1], strides = [1, 1]} : vector<8x9xf32> to vector<8x1xf32>
    %111 = vector.shape_cast %110 : vector<8x1xf32> to vector<1x8x1xf32>
    %112 = vector.extract_strided_slice %66 {offsets = [0, 0, 147], sizes = [2, 8, 640], strides = [1, 1, 1]} : vector<2x8x896xf32> to vector<2x8x640xf32>
    %113 = vector.broadcast %111 : vector<1x8x1xf32> to vector<2x8x640xf32>
    %114 = arith.mulf %113, %112 : vector<2x8x640xf32>
    %115 = arith.addf %109, %114 : vector<2x8x640xf32>
    %116 = vector.extract_strided_slice %67 {offsets = [0, 8], sizes = [8, 1], strides = [1, 1]} : vector<8x9xf32> to vector<8x1xf32>
    %117 = vector.shape_cast %116 : vector<8x1xf32> to vector<1x8x1xf32>
    %118 = vector.extract_strided_slice %66 {offsets = [0, 0, 150], sizes = [2, 8, 640], strides = [1, 1, 1]} : vector<2x8x896xf32> to vector<2x8x640xf32>
    %119 = vector.broadcast %117 : vector<1x8x1xf32> to vector<2x8x640xf32>
    %120 = arith.mulf %119, %118 : vector<2x8x640xf32>
    %121 = arith.addf %115, %120 : vector<2x8x640xf32>
    %122 = vector.shape_cast %68 : vector<8x1xf32> to vector<1x8x1xf32>
    %123 = vector.broadcast %122 : vector<1x8x1xf32> to vector<2x8x640xf32>
    %124 = arith.addf %121, %123 : vector<2x8x640xf32>
    %c10_32 = arith.constant 10 : index
    %c0_33 = arith.constant 0 : index
    %125 = vector.load %arg1[%c10_32, %c0_33] : memref<40x640xf32, #tpu.memory_space<vmem>>, vector<1x640xf32>
    %126 = vector.shape_cast %125 : vector<1x640xf32> to vector<1x1x640xf32>
    %127 = vector.broadcast %126 : vector<1x1x640xf32> to vector<2x8x640xf32>
    %128 = arith.mulf %124, %127 : vector<2x8x640xf32>
    %cst = arith.constant dense<0.000000e+00> : vector<2x8xf32>
    %129 = vector.multi_reduction <add>, %128, %cst [2] : vector<2x8x640xf32> to vector<2x8xf32>
    %130 = vector.shape_cast %129 : vector<2x8xf32> to vector<2x8x1xf32>
    %cst_34 = arith.constant 3.906250e-03 : f32
    %131 = vector.broadcast %cst_34 : f32 to vector<2x8x1xf32>
    %132 = arith.mulf %130, %131 : vector<2x8x1xf32>
    %133 = vector.broadcast %132 : vector<2x8x1xf32> to vector<2x8x640xf32>
    %134 = arith.subf %124, %133 : vector<2x8x640xf32>
    %135 = vector.shape_cast %125 : vector<1x640xf32> to vector<1x1x640xf32>
    %136 = vector.broadcast %135 : vector<1x1x640xf32> to vector<2x8x640xf32>
    %137 = arith.mulf %134, %136 : vector<2x8x640xf32>
    %138 = arith.mulf %137, %137 : vector<2x8x640xf32>
    %cst_35 = arith.constant dense<0.000000e+00> : vector<2x8xf32>
    %139 = vector.multi_reduction <add>, %138, %cst_35 [2] : vector<2x8x640xf32> to vector<2x8xf32>
    %140 = vector.shape_cast %139 : vector<2x8xf32> to vector<2x8x1xf32>
    %cst_36 = arith.constant 3.906250e-03 : f32
    %141 = vector.broadcast %cst_36 : f32 to vector<2x8x1xf32>
    %142 = arith.mulf %140, %141 : vector<2x8x1xf32>
    %c8_37 = arith.constant 8 : index
    %c0_38 = arith.constant 0 : index
    %143 = vector.load %arg1[%c8_37, %c0_38] : memref<40x640xf32, #tpu.memory_space<vmem>>, vector<1x640xf32>
    %c9_39 = arith.constant 9 : index
    %c0_40 = arith.constant 0 : index
    %144 = vector.load %arg1[%c9_39, %c0_40] : memref<40x640xf32, #tpu.memory_space<vmem>>, vector<1x640xf32>
    %cst_41 = arith.constant 9.99999974E-6 : f32
    %145 = vector.broadcast %cst_41 : f32 to vector<2x8x1xf32>
    %146 = arith.addf %142, %145 : vector<2x8x1xf32>
    %147 = math.rsqrt %146 : vector<2x8x1xf32>
    %148 = vector.broadcast %147 : vector<2x8x1xf32> to vector<2x8x640xf32>
    %149 = arith.mulf %134, %148 : vector<2x8x640xf32>
    %150 = vector.shape_cast %143 : vector<1x640xf32> to vector<1x1x640xf32>
    %151 = vector.broadcast %150 : vector<1x1x640xf32> to vector<2x8x640xf32>
    %152 = arith.mulf %149, %151 : vector<2x8x640xf32>
    %153 = vector.shape_cast %144 : vector<1x640xf32> to vector<1x1x640xf32>
    %154 = vector.broadcast %153 : vector<1x1x640xf32> to vector<2x8x640xf32>
    %155 = arith.addf %152, %154 : vector<2x8x640xf32>
    %156 = vector.extract_strided_slice %155 {offsets = [0, 0, 0], sizes = [1, 8, 640], strides = [1, 1, 1]} : vector<2x8x640xf32> to vector<1x8x640xf32>
    %157 = vector.shape_cast %156 : vector<1x8x640xf32> to vector<8x640xf32>
    %158 = vector.extract_strided_slice %155 {offsets = [1, 0, 0], sizes = [1, 8, 640], strides = [1, 1, 1]} : vector<2x8x640xf32> to vector<1x8x640xf32>
    %159 = vector.shape_cast %158 : vector<1x8x640xf32> to vector<8x640xf32>
    %160 = tpu.concatenate %157, %159 in 1 : vector<8x640xf32>, vector<8x640xf32> -> vector<8x1280xf32>
    %c16 = arith.constant 16 : index
    %c0_42 = arith.constant 0 : index
    %161 = vector.load %arg1[%c16, %c0_42] : memref<40x640xf32, #tpu.memory_space<vmem>>, vector<16x8xf32>
    %c16_43 = arith.constant 16 : index
    %c8_44 = arith.constant 8 : index
    %162 = vector.load %arg1[%c16_43, %c8_44] : memref<40x640xf32, #tpu.memory_space<vmem>>, vector<16x1xf32>
    %cst_45 = arith.constant dense<0.000000e+00> : vector<16x1280xf32>
    %163 = tpu.matmul %161, %160, %cst_45 {dimension_numbers = #tpu.dot_dimension_numbers<[1], [0], [0], [1], [0, 0, 1, 1], [], []>} : vector<16x8xf32>, vector<8x1280xf32>, vector<16x1280xf32> -> vector<16x1280xf32>
    %164 = vector.broadcast %162 : vector<16x1xf32> to vector<16x1280xf32>
    %165 = arith.addf %163, %164 : vector<16x1280xf32>
    %cst_46 = arith.constant 5.000000e-01 : f32
    %166 = vector.broadcast %cst_46 : f32 to vector<16x1280xf32>
    %167 = arith.mulf %166, %165 : vector<16x1280xf32>
    %cst_47 = arith.constant 0.707106769 : f32
    %168 = vector.broadcast %cst_47 : f32 to vector<16x1280xf32>
    %169 = arith.mulf %165, %168 : vector<16x1280xf32>
    %170 = math.erf %169 : vector<16x1280xf32>
    %cst_48 = arith.constant 1.000000e+00 : f32
    %171 = vector.broadcast %cst_48 : f32 to vector<16x1280xf32>
    %172 = arith.addf %171, %170 : vector<16x1280xf32>
    %173 = arith.mulf %167, %172 : vector<16x1280xf32>
    %c32 = arith.constant 32 : index
    %c0_49 = arith.constant 0 : index
    %174 = vector.load %arg1[%c32, %c0_49] : memref<40x640xf32, #tpu.memory_space<vmem>>, vector<8x16xf32>
    %c32_50 = arith.constant 32 : index
    %c16_51 = arith.constant 16 : index
    %175 = vector.load %arg1[%c32_50, %c16_51] : memref<40x640xf32, #tpu.memory_space<vmem>>, vector<8x1xf32>
    %cst_52 = arith.constant dense<0.000000e+00> : vector<8x1280xf32>
    %176 = tpu.matmul %174, %173, %cst_52 {dimension_numbers = #tpu.dot_dimension_numbers<[1], [0], [0], [1], [0, 0, 1, 1], [], []>} : vector<8x16xf32>, vector<16x1280xf32>, vector<8x1280xf32> -> vector<8x1280xf32>
    %177 = vector.broadcast %175 : vector<8x1xf32> to vector<8x1280xf32>
    %178 = arith.addf %176, %177 : vector<8x1280xf32>
    %c0_53 = arith.constant 0 : index
    %c0_54 = arith.constant 0 : index
    %179 = vector.load %arg2[%c0_53, %c0_54] : memref<8x1280xf32, #tpu.memory_space<vmem>>, vector<8x1280xf32>
    %180 = arith.addf %178, %179 : vector<8x1280xf32>
    %c0_55 = arith.constant 0 : index
    %c0_56 = arith.constant 0 : index
    %181 = vector.load %arg3[%c0_55, %c0_56] : memref<8x1280xf32, #tpu.memory_space<vmem>>, vector<8x1280xf32>
    tpu.vector_store %arg3[%c0_55, %c0_56], %180 {strides = array<i32>} : memref<8x1280xf32, #tpu.memory_space<vmem>>, vector<8x1280xf32>,
    return
  }
}

</mosaic_0001>

<llo_original>
// kernel: tpu_custom_call.1
$region0: #{tpu_custom_call.1}
  #allocation0 [shape = 'u32[]', space=smem, size = 0x4, offset = 0x4, fixed_abs, tag = 'smem constant byte address 0x4 - core index']
  #allocation1 [shape = 'u32[144,128]{1,0:T(1,128)}', space=vmem, size = 0x12000, scoped, tag = 'internal scratch']
  %s0 = inlined_call_operand.hbm [shape: f32[9,2,8,896], index: 0, kind: input, shape index: {}]
  %s1 = inlined_call_operand.hbm [shape: f32[40,640], index: 1, kind: input, shape index: {}]
  %s2 = inlined_call_operand.hbm [shape: f32[8,1280], index: 2, kind: input, shape index: {}]
  %s3 = inlined_call_operand.hbm [shape: f32[8,1280], index: 3, kind: output, shape index: {}]
  %s4 = sld [smem:[#allocation0]]
  $region34: #{tpu_custom_call.1} parent=0
    _
  %s6 = ssub.s32 1, %s4
  %s7 = scalar_select 0, %s6, %s4
  $region1: #{tpu_custom_call.1} parent=0
    #allocation2 [shape = 'u8[516096]{0}', space=vmem, size = 0x7e000, scoped, tag = 'input window, operand 0, single buffered']
    #allocation3 [shape = 's32[1]{0}', space=sflag, size = 0x4, scoped, tag = 'scoped memory for tpu_custom_call.1']
    #allocation4 [shape = 's32[1]{0}', space=sflag, size = 0x4, scoped, tag = 'scoped memory for tpu_custom_call.1']
    #allocation5 [shape = 'u8[102400]{0}', space=vmem, size = 0x19000, scoped, tag = 'input window, operand 1, single buffered']
    #allocation6 [shape = 's32[1]{0}', space=sflag, size = 0x4, scoped, tag = 'scoped memory for tpu_custom_call.1']
    #allocation7 [shape = 'u8[40960]{0}', space=vmem, size = 0xa000, scoped, tag = 'input window, operand 2, single buffered']
    #allocation8 [shape = 'u8[40960]{0}', space=vmem, size = 0xa000, scoped, tag = 'output window, operand 0, single buffered']
    %8 = vsyncpa [#allocation3], 0
    %9 = vsyncpa [#allocation6], 0
    %10 = vsyncpa [#allocation4], 0
    // Predicated region
    $region2: #{tpu_custom_call.1} parent=1 // pred_check
      _
    $region3: #{tpu_custom_call.1} parent=1 // pred_check_branch
      %12 = sbr.rel (0) target = $region5
    $region4: #{tpu_custom_call.1} parent=1 // pred_region
      %s14 = ssub.s32 16128, 16128
      %15 = vsyncadd [#allocation3], %s14
      %s16 = sshll.u32 [#allocation2], 4
      %s17 = int_to_ptr.vmem [resolvable:$true] %s16
      %22 = dma.hbm_to_vmem [thread:$0]  %s0, 16128, %s17, [#allocation3], 896, 896, 56
    $region5: #{tpu_custom_call.1} parent=1 // pred_fallthru
      _
    // Predicated region
    $region6: #{tpu_custom_call.1} parent=1 // pred_check
      _
    $region7: #{tpu_custom_call.1} parent=1 // pred_check_branch
      %24 = sbr.rel (0) target = $region9
    $region8: #{tpu_custom_call.1} parent=1 // pred_region
      %s26 = ssub.s32 3200, 3200
      %27 = vsyncadd [#allocation6], %s26
      %s28 = sshll.u32 [#allocation5], 4
      %s29 = int_to_ptr.vmem [resolvable:$true] %s28
      %34 = dma.hbm_to_vmem [thread:$0]  %s1, 3200, %s29, [#allocation6], 640, 640, 40
    $region9: #{tpu_custom_call.1} parent=1 // pred_fallthru
      _
    // Predicated region
    $region10: #{tpu_custom_call.1} parent=1 // pred_check
      _
    $region11: #{tpu_custom_call.1} parent=1 // pred_check_branch
      %36 = sbr.rel (0) target = $region13
    $region12: #{tpu_custom_call.1} parent=1 // pred_region
      %s38 = ssub.s32 1280, 1280
      %39 = vsyncadd [#allocation6], %s38
      %s41 = sshll.u32 [#allocation7], 4
      %s42 = int_to_ptr.vmem [resolvable:$true] %s41
      %44 = dma.hbm_to_vmem [thread:$0]  %s2, 1280, %s42, [#allocation6]
    $region13: #{tpu_custom_call.1} parent=1 // pred_fallthru
      _
    // Predicated region
    $region14: #{tpu_custom_call.1} parent=1 // pred_check
      _
    $region15: #{tpu_custom_call.1} parent=1 // pred_check_branch
      %46 = sbr.rel (0) target = $region17
    $region16: #{tpu_custom_call.1} parent=1 // pred_region
      %47 = dma.done [#allocation3], 16128
    $region17: #{tpu_custom_call.1} parent=1 // pred_fallthru
      _
    // Predicated region
    $region18: #{tpu_custom_call.1} parent=1 // pred_check
      _
    $region19: #{tpu_custom_call.1} parent=1 // pred_check_branch
      %49 = sbr.rel (0) target = $region21
    $region20: #{tpu_custom_call.1} parent=1 // pred_region
      %50 = dma.done [#allocation6], 3200
    $region21: #{tpu_custom_call.1} parent=1 // pred_fallthru
      _
    // Predicated region
    $region22: #{tpu_custom_call.1} parent=1 // pred_check
      _
    $region23: #{tpu_custom_call.1} parent=1 // pred_check_branch
      %52 = sbr.rel (0) target = $region25
    $region24: #{tpu_custom_call.1} parent=1 // pred_region
      %53 = dma.done [#allocation6], 1280
    $region25: #{tpu_custom_call.1} parent=1 // pred_fallthru
      _
    %v54 = vld [vmem:[#allocation5] sm:$0xff]
    %v55 = vld [vmem:[#allocation2] sm:$0xff]
    %v56 = vld [vmem:[#allocation2 + $0x8] sm:$0xff]
    %v57 = vld [vmem:[#allocation2 + $0x10] sm:$0xff]
    %v58 = vld [vmem:[#allocation2 + $0x18] sm:$0xff]
    %v59 = vld [vmem:[#allocation2 + $0x20] sm:$0xff]
    %v60 = vld [vmem:[#allocation2 + $0x28] sm:$0xff]
    %v61 = vld [vmem:[#allocation2 + $0x30] sm:$0xff]
    %v62 = vld [vmem:[#allocation2 + $0x38] sm:$0xff]
    %v63 = vld [vmem:[#allocation2 + $0x40] sm:$0xff]
    %v64 = vld [vmem:[#allocation2 + $0x48] sm:$0xff]
    %v65 = vld [vmem:[#allocation2 + $0x50] sm:$0xff]
    %v66 = vld [vmem:[#allocation2 + $0x58] sm:$0xff]
    %v67 = vld [vmem:[#allocation2 + $0x60] sm:$0xff]
    %v68 = vld [vmem:[#allocation2 + $0x68] sm:$0xff]
    %70 = vset.pattern.permute.xlu0 0
    %71 = vperm.xlu0 %70, %v54
    %v72 = vpop.permute.xlu0 %71
    %v74 = vmul.f32 %v55, %v72
    %v75 = vmul.f32 %v56, %v72
    %v76 = vmul.f32 %v57, %v72
    %v77 = vmul.f32 %v58, %v72
    %v78 = vmul.f32 %v59, %v72
    %v79 = vmul.f32 %v60, %v72
    %v80 = vmul.f32 %v61, %v72
    %v81 = vmul.f32 %v62, %v72
    %v82 = vmul.f32 %v63, %v72
    %v83 = vmul.f32 %v64, %v72
    %v84 = vmul.f32 %v65, %v72
    %v85 = vmul.f32 %v66, %v72
    %v86 = vmul.f32 %v67, %v72
    %v87 = vmul.f32 %v68, %v72
    %s88 = scalar_lea.vmem [#allocation2], 112
    %v89 = vld [vmem:[%s88] sm:$0xff]
    %v90 = vld [vmem:[%s88 + $0x8] sm:$0xff]
    %v91 = vld [vmem:[%s88 + $0x10] sm:$0xff]
    %v92 = vld [vmem:[%s88 + $0x18] sm:$0xff]
    %v93 = vld [vmem:[%s88 + $0x20] sm:$0xff]
    %v94 = vld [vmem:[%s88 + $0x28] sm:$0xff]
    %v95 = vld [vmem:[%s88 + $0x30] sm:$0xff]
    %v96 = vld [vmem:[%s88 + $0x38] sm:$0xff]
    %v97 = vld [vmem:[%s88 + $0x40] sm:$0xff]
    %v98 = vld [vmem:[%s88 + $0x48] sm:$0xff]
    %v99 = vld [vmem:[%s88 + $0x50] sm:$0xff]
    %v100 = vld [vmem:[%s88 + $0x58] sm:$0xff]
    %v101 = vld [vmem:[%s88 + $0x60] sm:$0xff]
    %v102 = vld [vmem:[%s88 + $0x68] sm:$0xff]
    %103 = vset.pattern.permute.xlu0 1
    %104 = vperm.xlu0 %103, %v54
    %v105 = vpop.permute.xlu0 %104
    %v107 = vmul.f32 %v89, %v105
    %v108 = vmul.f32 %v90, %v105
    %v109 = vmul.f32 %v91, %v105
    %v110 = vmul.f32 %v92, %v105
    %v111 = vmul.f32 %v93, %v105
    %v112 = vmul.f32 %v94, %v105
    %v113 = vmul.f32 %v95, %v105
    %v114 = vmul.f32 %v96, %v105
    %v115 = vmul.f32 %v97, %v105
    %v116 = vmul.f32 %v98, %v105
    %v117 = vmul.f32 %v99, %v105
    %v118 = vmul.f32 %v100, %v105
    %v119 = vmul.f32 %v101, %v105
    %v120 = vmul.f32 %v102, %v105
    %v121 = vadd.f32 %v74, %v107
    %v122 = vadd.f32 %v75, %v108
    %v123 = vadd.f32 %v76, %v109
    %v124 = vadd.f32 %v77, %v110
    %v125 = vadd.f32 %v78, %v111
    %v126 = vadd.f32 %v79, %v112
    %v127 = vadd.f32 %v80, %v113
    %v128 = vadd.f32 %v81, %v114
    %v129 = vadd.f32 %v82, %v115
    %v130 = vadd.f32 %v83, %v116
    %v131 = vadd.f32 %v84, %v117
    %v132 = vadd.f32 %v85, %v118
    %v133 = vadd.f32 %v86, %v119
    %v134 = vadd.f32 %v87, %v120
    %s135 = scalar_lea.vmem [#allocation2], 224
    %v136 = vld [vmem:[%s135] sm:$0xff]
    %v137 = vld [vmem:[%s135 + $0x8] sm:$0xff]
    %v138 = vld [vmem:[%s135 + $0x10] sm:$0xff]
    %v139 = vld [vmem:[%s135 + $0x18] sm:$0xff]
    %v140 = vld [vmem:[%s135 + $0x20] sm:$0xff]
    %v141 = vld [vmem:[%s135 + $0x28] sm:$0xff]
    %v142 = vld [vmem:[%s135 + $0x30] sm:$0xff]
    %v143 = vld [vmem:[%s135 + $0x38] sm:$0xff]
    %v144 = vld [vmem:[%s135 + $0x40] sm:$0xff]
    %v145 = vld [vmem:[%s135 + $0x48] sm:$0xff]
    %v146 = vld [vmem:[%s135 + $0x50] sm:$0xff]
    %v147 = vld [vmem:[%s135 + $0x58] sm:$0xff]
    %v148 = vld [vmem:[%s135 + $0x60] sm:$0xff]
    %v149 = vld [vmem:[%s135 + $0x68] sm:$0xff]
    %150 = vset.pattern.permute.xlu0 2
    %151 = vperm.xlu0 %150, %v54
    %v152 = vpop.permute.xlu0 %151
    %v154 = vmul.f32 %v136, %v152
    %v155 = vmul.f32 %v137, %v152
    %v156 = vmul.f32 %v138, %v152
    %v157 = vmul.f32 %v139, %v152
    %v158 = vmul.f32 %v140, %v152
    %v159 = vmul.f32 %v141, %v152
    %v160 = vmul.f32 %v142, %v152
    %v161 = vmul.f32 %v143, %v152
    %v162 = vmul.f32 %v144, %v152
    %v163 = vmul.f32 %v145, %v152
    %v164 = vmul.f32 %v146, %v152
    %v165 = vmul.f32 %v147, %v152
    %v166 = vmul.f32 %v148, %v152
    %v167 = vmul.f32 %v149, %v152
    %v168 = vadd.f32 %v121, %v154
    %v169 = vadd.f32 %v122, %v155
    %v170 = vadd.f32 %v123, %v156
    %v171 = vadd.f32 %v124, %v157
    %v172 = vadd.f32 %v125, %v158
    %v173 = vadd.f32 %v126, %v159
    %v174 = vadd.f32 %v127, %v160
    %v175 = vadd.f32 %v128, %v161
    %v176 = vadd.f32 %v129, %v162
    %v177 = vadd.f32 %v130, %v163
    %v178 = vadd.f32 %v131, %v164
    %v179 = vadd.f32 %v132, %v165
    %v180 = vadd.f32 %v133, %v166
    %v181 = vadd.f32 %v134, %v167
    %s182 = scalar_lea.vmem [#allocation2], 336
    %v183 = vld [vmem:[%s182] sm:$0xff]
    %v184 = vld [vmem:[%s182 + $0x8] sm:$0xff]
    %v185 = vld [vmem:[%s182 + $0x10] sm:$0xff]
    %v186 = vld [vmem:[%s182 + $0x18] sm:$0xff]
    %v187 = vld [vmem:[%s182 + $0x20] sm:$0xff]
    %v188 = vld [vmem:[%s182 + $0x28] sm:$0xff]
    %v189 = vld [vmem:[%s182 + $0x30] sm:$0xff]
    %v190 = vld [vmem:[%s182 + $0x38] sm:$0xff]
    %v191 = vld [vmem:[%s182 + $0x40] sm:$0xff]
    %v192 = vld [vmem:[%s182 + $0x48] sm:$0xff]
    %v193 = vld [vmem:[%s182 + $0x50] sm:$0xff]
    %v194 = vld [vmem:[%s182 + $0x58] sm:$0xff]
    %v195 = vld [vmem:[%s182 + $0x60] sm:$0xff]
    %v196 = vld [vmem:[%s182 + $0x68] sm:$0xff]
    %197 = vset.pattern.permute.xlu0 3
    %198 = vperm.xlu0 %197, %v54
    %v199 = vpop.permute.xlu0 %198
    %v201 = vmul.f32 %v183, %v199
    %v202 = vmul.f32 %v184, %v199
    %v203 = vmul.f32 %v185, %v199
    %v204 = vmul.f32 %v186, %v199
    %v205 = vmul.f32 %v187, %v199
    %v206 = vmul.f32 %v188, %v199
    %v207 = vmul.f32 %v189, %v199
    %v208 = vmul.f32 %v190, %v199
    %v209 = vmul.f32 %v191, %v199
    %v210 = vmul.f32 %v192, %v199
    %v211 = vmul.f32 %v193, %v199
    %v212 = vmul.f32 %v194, %v199
    %v213 = vmul.f32 %v195, %v199
    %v214 = vmul.f32 %v196, %v199
    %v215 = vadd.f32 %v168, %v201
    %v216 = vadd.f32 %v169, %v202
    %v217 = vadd.f32 %v170, %v203
    %v218 = vadd.f32 %v171, %v204
    %v219 = vadd.f32 %v172, %v205
    %v220 = vadd.f32 %v173, %v206
    %v221 = vadd.f32 %v174, %v207
    %v222 = vadd.f32 %v175, %v208
    %v223 = vadd.f32 %v176, %v209
    %v224 = vadd.f32 %v177, %v210
    %v225 = vadd.f32 %v178, %v211
    %v226 = vadd.f32 %v179, %v212
    %v227 = vadd.f32 %v180, %v213
    %v228 = vadd.f32 %v181, %v214
    %s229 = scalar_lea.vmem [#allocation2], 448
    %v230 = vld [vmem:[%s229] sm:$0xff]
    %v231 = vld [vmem:[%s229 + $0x8] sm:$0xff]
    %v232 = vld [vmem:[%s229 + $0x10] sm:$0xff]
    %v233 = vld [vmem:[%s229 + $0x18] sm:$0xff]
    %v234 = vld [vmem:[%s229 + $0x20] sm:$0xff]
    %v235 = vld [vmem:[%s229 + $0x28] sm:$0xff]
    %v236 = vld [vmem:[%s229 + $0x30] sm:$0xff]
    %v237 = vld [vmem:[%s229 + $0x38] sm:$0xff]
    %v238 = vld [vmem:[%s229 + $0x40] sm:$0xff]
    %v239 = vld [vmem:[%s229 + $0x48] sm:$0xff]
    %v240 = vld [vmem:[%s229 + $0x50] sm:$0xff]
    %v241 = vld [vmem:[%s229 + $0x58] sm:$0xff]
    %v242 = vld [vmem:[%s229 + $0x60] sm:$0xff]
    %v243 = vld [vmem:[%s229 + $0x68] sm:$0xff]
    %244 = vset.pattern.permute.xlu0 4
    %245 = vperm.xlu0 %244, %v54
    %v246 = vpop.permute.xlu0 %245
    %v248 = vmul.f32 %v230, %v246
    %v249 = vmul.f32 %v231, %v246
    %v250 = vmul.f32 %v232, %v246
    %v251 = vmul.f32 %v233, %v246
    %v252 = vmul.f32 %v234, %v246
    %v253 = vmul.f32 %v235, %v246
    %v254 = vmul.f32 %v236, %v246
    %v255 = vmul.f32 %v237, %v246
    %v256 = vmul.f32 %v238, %v246
    %v257 = vmul.f32 %v239, %v246
    %v258 = vmul.f32 %v240, %v246
    %v259 = vmul.f32 %v241, %v246
    %v260 = vmul.f32 %v242, %v246
    %v261 = vmul.f32 %v243, %v246
    %v262 = vadd.f32 %v215, %v248
    %v263 = vadd.f32 %v216, %v249
    %v264 = vadd.f32 %v217, %v250
    %v265 = vadd.f32 %v218, %v251
    %v266 = vadd.f32 %v219, %v252
    %v267 = vadd.f32 %v220, %v253
    %v268 = vadd.f32 %v221, %v254
    %v269 = vadd.f32 %v222, %v255
    %v270 = vadd.f32 %v223, %v256
    %v271 = vadd.f32 %v224, %v257
    %v272 = vadd.f32 %v225, %v258
    %v273 = vadd.f32 %v226, %v259
    %v274 = vadd.f32 %v227, %v260
    %v275 = vadd.f32 %v228, %v261
    %s276 = scalar_lea.vmem [#allocation2], 560
    %v277 = vld [vmem:[%s276] sm:$0xff]
    %v278 = vld [vmem:[%s276 + $0x8] sm:$0xff]
    %v279 = vld [vmem:[%s276 + $0x10] sm:$0xff]
    %v280 = vld [vmem:[%s276 + $0x18] sm:$0xff]
    %v281 = vld [vmem:[%s276 + $0x20] sm:$0xff]
    %v282 = vld [vmem:[%s276 + $0x28] sm:$0xff]
    %v283 = vld [vmem:[%s276 + $0x30] sm:$0xff]
    %v284 = vld [vmem:[%s276 + $0x38] sm:$0xff]
    %v285 = vld [vmem:[%s276 + $0x40] sm:$0xff]
    %v286 = vld [vmem:[%s276 + $0x48] sm:$0xff]
    %v287 = vld [vmem:[%s276 + $0x50] sm:$0xff]
    %v288 = vld [vmem:[%s276 + $0x58] sm:$0xff]
    %v289 = vld [vmem:[%s276 + $0x60] sm:$0xff]
    %v290 = vld [vmem:[%s276 + $0x68] sm:$0xff]
    %291 = vset.pattern.permute.xlu0 5
    %292 = vperm.xlu0 %291, %v54
    %v293 = vpop.permute.xlu0 %292
    %v295 = vmul.f32 %v277, %v293
    %v296 = vmul.f32 %v278, %v293
    %v297 = vmul.f32 %v279, %v293
    %v298 = vmul.f32 %v280, %v293
    %v299 = vmul.f32 %v281, %v293
    %v300 = vmul.f32 %v282, %v293
    %v301 = vmul.f32 %v283, %v293
    %v302 = vmul.f32 %v284, %v293
    %v303 = vmul.f32 %v285, %v293
    %v304 = vmul.f32 %v286, %v293
    %v305 = vmul.f32 %v287, %v293
    %v306 = vmul.f32 %v288, %v293
    %v307 = vmul.f32 %v289, %v293
    %v308 = vmul.f32 %v290, %v293
    %v309 = vadd.f32 %v262, %v295
    %v310 = vadd.f32 %v263, %v296
    %v311 = vadd.f32 %v264, %v297
    %v312 = vadd.f32 %v265, %v298
    %v313 = vadd.f32 %v266, %v299
    %v314 = vadd.f32 %v267, %v300
    %v315 = vadd.f32 %v268, %v301
    %v316 = vadd.f32 %v269, %v302
    %v317 = vadd.f32 %v270, %v303
    %v318 = vadd.f32 %v271, %v304
    %v319 = vadd.f32 %v272, %v305
    %v320 = vadd.f32 %v273, %v306
    %v321 = vadd.f32 %v274, %v307
    %v322 = vadd.f32 %v275, %v308
    %s323 = scalar_lea.vmem [#allocation2], 672
    %v324 = vld [vmem:[%s323] sm:$0xff]
    %v325 = vld [vmem:[%s323 + $0x8] sm:$0xff]
    %v326 = vld [vmem:[%s323 + $0x10] sm:$0xff]
    %v327 = vld [vmem:[%s323 + $0x18] sm:$0xff]
    %v328 = vld [vmem:[%s323 + $0x20] sm:$0xff]
    %v329 = vld [vmem:[%s323 + $0x28] sm:$0xff]
    %v330 = vld [vmem:[%s323 + $0x30] sm:$0xff]
    %v331 = vld [vmem:[%s323 + $0x38] sm:$0xff]
    %v332 = vld [vmem:[%s323 + $0x40] sm:$0xff]
    %v333 = vld [vmem:[%s323 + $0x48] sm:$0xff]
    %v334 = vld [vmem:[%s323 + $0x50] sm:$0xff]
    %v335 = vld [vmem:[%s323 + $0x58] sm:$0xff]
    %v336 = vld [vmem:[%s323 + $0x60] sm:$0xff]
    %v337 = vld [vmem:[%s323 + $0x68] sm:$0xff]
    %338 = vset.pattern.permute.xlu0 6
    %339 = vperm.xlu0 %338, %v54
    %v340 = vpop.permute.xlu0 %339
    %v342 = vmul.f32 %v324, %v340
    %v343 = vmul.f32 %v325, %v340
    %v344 = vmul.f32 %v326, %v340
    %v345 = vmul.f32 %v327, %v340
    %v346 = vmul.f32 %v328, %v340
    %v347 = vmul.f32 %v329, %v340
    %v348 = vmul.f32 %v330, %v340
    %v349 = vmul.f32 %v331, %v340
    %v350 = vmul.f32 %v332, %v340
    %v351 = vmul.f32 %v333, %v340
    %v352 = vmul.f32 %v334, %v340
    %v353 = vmul.f32 %v335, %v340
    %v354 = vmul.f32 %v336, %v340
    %v355 = vmul.f32 %v337, %v340
    %v356 = vadd.f32 %v309, %v342
    %v357 = vadd.f32 %v310, %v343
    %v358 = vadd.f32 %v311, %v344
    %v359 = vadd.f32 %v312, %v345
    %v360 = vadd.f32 %v313, %v346
    %v361 = vadd.f32 %v314, %v347
    %v362 = vadd.f32 %v315, %v348
    %v363 = vadd.f32 %v316, %v349
    %v364 = vadd.f32 %v317, %v350
    %v365 = vadd.f32 %v318, %v351
    %v366 = vadd.f32 %v319, %v352
    %v367 = vadd.f32 %v320, %v353
    %v368 = vadd.f32 %v321, %v354
    %v369 = vadd.f32 %v322, %v355
    %s370 = scalar_lea.vmem [#allocation2], 784
    %v371 = vld [vmem:[%s370] sm:$0xff]
    %v372 = vld [vmem:[%s370 + $0x8] sm:$0xff]
    %v373 = vld [vmem:[%s370 + $0x10] sm:$0xff]
    %v374 = vld [vmem:[%s370 + $0x18] sm:$0xff]
    %v375 = vld [vmem:[%s370 + $0x20] sm:$0xff]
    %v376 = vld [vmem:[%s370 + $0x28] sm:$0xff]
    %v377 = vld [vmem:[%s370 + $0x30] sm:$0xff]
    %v378 = vld [vmem:[%s370 + $0x38] sm:$0xff]
    %v379 = vld [vmem:[%s370 + $0x40] sm:$0xff]
    %v380 = vld [vmem:[%s370 + $0x48] sm:$0xff]
    %v381 = vld [vmem:[%s370 + $0x50] sm:$0xff]
    %v382 = vld [vmem:[%s370 + $0x58] sm:$0xff]
    %v383 = vld [vmem:[%s370 + $0x60] sm:$0xff]
    %v384 = vld [vmem:[%s370 + $0x68] sm:$0xff]
    %385 = vset.pattern.permute.xlu0 7
    %386 = vperm.xlu0 %385, %v54
    %v387 = vpop.permute.xlu0 %386
    %v389 = vmul.f32 %v371, %v387
    %v390 = vmul.f32 %v372, %v387
    %v391 = vmul.f32 %v373, %v387
    %v392 = vmul.f32 %v374, %v387
    %v393 = vmul.f32 %v375, %v387
    %v394 = vmul.f32 %v376, %v387
    %v395 = vmul.f32 %v377, %v387
    %v396 = vmul.f32 %v378, %v387
    %v397 = vmul.f32 %v379, %v387
    %v398 = vmul.f32 %v380, %v387
    %v399 = vmul.f32 %v381, %v387
    %v400 = vmul.f32 %v382, %v387
    %v401 = vmul.f32 %v383, %v387
    %v402 = vmul.f32 %v384, %v387
    %v403 = vadd.f32 %v356, %v389
    %v404 = vadd.f32 %v357, %v390
    %v405 = vadd.f32 %v358, %v391
    %v406 = vadd.f32 %v359, %v392
    %v407 = vadd.f32 %v360, %v393
    %v408 = vadd.f32 %v361, %v394
    %v409 = vadd.f32 %v362, %v395
    %v410 = vadd.f32 %v363, %v396
    %v411 = vadd.f32 %v364, %v397
    %v412 = vadd.f32 %v365, %v398
    %v413 = vadd.f32 %v366, %v399
    %v414 = vadd.f32 %v367, %v400
    %v415 = vadd.f32 %v368, %v401
    %v416 = vadd.f32 %v369, %v402
    %s417 = scalar_lea.vmem [#allocation2], 896
    %v418 = vld [vmem:[%s417] sm:$0xff]
    %v419 = vld [vmem:[%s417 + $0x8] sm:$0xff]
    %v420 = vld [vmem:[%s417 + $0x10] sm:$0xff]
    %v421 = vld [vmem:[%s417 + $0x18] sm:$0xff]
    %v422 = vld [vmem:[%s417 + $0x20] sm:$0xff]
    %v423 = vld [vmem:[%s417 + $0x28] sm:$0xff]
    %v424 = vld [vmem:[%s417 + $0x30] sm:$0xff]
    %v425 = vld [vmem:[%s417 + $0x38] sm:$0xff]
    %v426 = vld [vmem:[%s417 + $0x40] sm:$0xff]
    %v427 = vld [vmem:[%s417 + $0x48] sm:$0xff]
    %v428 = vld [vmem:[%s417 + $0x50] sm:$0xff]
    %v429 = vld [vmem:[%s417 + $0x58] sm:$0xff]
    %v430 = vld [vmem:[%s417 + $0x60] sm:$0xff]
    %v431 = vld [vmem:[%s417 + $0x68] sm:$0xff]
    %432 = vset.pattern.permute.xlu0 8
    %433 = vperm.xlu0 %432, %v54
    %v434 = vpop.permute.xlu0 %433
    %v436 = vmul.f32 %v418, %v434
    %v437 = vmul.f32 %v419, %v434
    %v438 = vmul.f32 %v420, %v434
    %v439 = vmul.f32 %v421, %v434
    %v440 = vmul.f32 %v422, %v434
    %v441 = vmul.f32 %v423, %v434
    %v442 = vmul.f32 %v424, %v434
    %v443 = vmul.f32 %v425, %v434
    %v444 = vmul.f32 %v426, %v434
    %v445 = vmul.f32 %v427, %v434
    %v446 = vmul.f32 %v428, %v434
    %v447 = vmul.f32 %v429, %v434
    %v448 = vmul.f32 %v430, %v434
    %v449 = vmul.f32 %v431, %v434
    %v450 = vadd.f32 %v403, %v436
    %v451 = vadd.f32 %v404, %v437
    %v452 = vadd.f32 %v405, %v438
    %v453 = vadd.f32 %v406, %v439
    %v454 = vadd.f32 %v407, %v440
    %v455 = vadd.f32 %v408, %v441
    %v456 = vadd.f32 %v409, %v442
    %v457 = vadd.f32 %v410, %v443
    %v458 = vadd.f32 %v411, %v444
    %v459 = vadd.f32 %v412, %v445
    %v460 = vadd.f32 %v413, %v446
    %v461 = vadd.f32 %v414, %v447
    %v462 = vadd.f32 %v415, %v448
    %v463 = vadd.f32 %v416, %v449
    %464 = vset.pattern.permute.xlu0 9
    %465 = vperm.xlu0 %464, %v54
    %v466 = vpop.permute.xlu0 %465
    %v468 = vadd.f32 %v450, %v466
    %v469 = vadd.f32 %v451, %v466
    %v470 = vadd.f32 %v452, %v466
    %v471 = vadd.f32 %v453, %v466
    %v472 = vadd.f32 %v454, %v466
    %v473 = vadd.f32 %v455, %v466
    %v474 = vadd.f32 %v456, %v466
    %v475 = vadd.f32 %v457, %v466
    %v476 = vadd.f32 %v458, %v466
    %v477 = vadd.f32 %v459, %v466
    %v478 = vadd.f32 %v460, %v466
    %v479 = vadd.f32 %v461, %v466
    %v480 = vadd.f32 %v462, %v466
    %v481 = vadd.f32 %v463, %v466
    %482 = vset.pattern.permute.xlu0 10
    %483 = vperm.xlu0 %482, %v54
    %v484 = vpop.permute.xlu0 %483
    %v486 = vmul.f32 %v484, %v468
    %v487 = vmul.f32 %v484, %v469
    %v488 = vmul.f32 %v484, %v470
    %v489 = vmul.f32 %v484, %v471
    %v490 = vmul.f32 %v484, %v472
    %v491 = vmul.f32 %v484, %v475
    %v492 = vmul.f32 %v484, %v476
    %v493 = vmul.f32 %v484, %v477
    %v494 = vmul.f32 %v484, %v478
    %v495 = vmul.f32 %v484, %v479
    %496 = vset.pattern.permute.xlu0 11
    %497 = vperm.xlu0 %496, %v54
    %v498 = vpop.permute.xlu0 %497
    %v500 = vmul.f32 %v498, %v468
    %v501 = vmul.f32 %v498, %v469
    %v502 = vmul.f32 %v498, %v470
    %v503 = vmul.f32 %v498, %v471
    %v504 = vmul.f32 %v498, %v472
    %v505 = vmul.f32 %v498, %v473
    %v506 = vmul.f32 %v498, %v475
    %v507 = vmul.f32 %v498, %v476
    %v508 = vmul.f32 %v498, %v477
    %v509 = vmul.f32 %v498, %v478
    %v510 = vmul.f32 %v498, %v479
    %v511 = vmul.f32 %v498, %v480
    %524 = vrot.lane.b32.xlu0 %v500, 125
    %v525 = vpop.permute.xlu0 %524
    %526 = vrot.lane.b32.xlu0 %v501, 125
    %v527 = vpop.permute.xlu0 %526
    %528 = vrot.lane.b32.xlu0 %v502, 125
    %v529 = vpop.permute.xlu0 %528
    %530 = vrot.lane.b32.xlu0 %v503, 125
    %v531 = vpop.permute.xlu0 %530
    %532 = vrot.lane.b32.xlu0 %v504, 125
    %v533 = vpop.permute.xlu0 %532
    %534 = vrot.lane.b32.xlu0 %v505, 125
    %v535 = vpop.permute.xlu0 %534
    %536 = vrot.lane.b32.xlu0 %v506, 125
    %v537 = vpop.permute.xlu0 %536
    %538 = vrot.lane.b32.xlu0 %v507, 125
    %v539 = vpop.permute.xlu0 %538
    %540 = vrot.lane.b32.xlu0 %v508, 125
    %v541 = vpop.permute.xlu0 %540
    %542 = vrot.lane.b32.xlu0 %v509, 125
    %v543 = vpop.permute.xlu0 %542
    %544 = vrot.lane.b32.xlu0 %v510, 125
    %v545 = vpop.permute.xlu0 %544
    %546 = vrot.lane.b32.xlu0 %v511, 125
    %v547 = vpop.permute.xlu0 %546
    %vm548 = vcmask 1022976
    %v549 = vsel %vm548, %v525, %v527
    %v550 = vsel %vm548, %v527, %v529
    %v551 = vsel %vm548, %v529, %v531
    %v552 = vsel %vm548, %v531, %v533
    %v553 = vsel %vm548, %v533, %v535
    %v554 = vsel %vm548, %v537, %v539
    %v555 = vsel %vm548, %v539, %v541
    %v556 = vsel %vm548, %v541, %v543
    %v557 = vsel %vm548, %v543, %v545
    %v558 = vsel %vm548, %v545, %v547
    %v569 = vadd.f32 %v486, %v549
    %v570 = vadd.f32 %v487, %v550
    %v571 = vadd.f32 %v488, %v551
    %v572 = vadd.f32 %v489, %v552
    %v573 = vadd.f32 %v490, %v553
    %v574 = vadd.f32 %v491, %v554
    %v575 = vadd.f32 %v492, %v555
    %v576 = vadd.f32 %v493, %v556
    %v577 = vadd.f32 %v494, %v557
    %v578 = vadd.f32 %v495, %v558
    %579 = vset.pattern.permute.xlu0 12
    %580 = vperm.xlu0 %579, %v54
    %v581 = vpop.permute.xlu0 %580
    %v583 = vmul.f32 %v581, %v468
    %v584 = vmul.f32 %v581, %v469
    %v585 = vmul.f32 %v581, %v470
    %v586 = vmul.f32 %v581, %v471
    %v587 = vmul.f32 %v581, %v472
    %v588 = vmul.f32 %v581, %v473
    %v589 = vmul.f32 %v581, %v475
    %v590 = vmul.f32 %v581, %v476
    %v591 = vmul.f32 %v581, %v477
    %v592 = vmul.f32 %v581, %v478
    %v593 = vmul.f32 %v581, %v479
    %v594 = vmul.f32 %v581, %v480
    %607 = vrot.lane.b32.xlu0 %v583, 122
    %v608 = vpop.permute.xlu0 %607
    %609 = vrot.lane.b32.xlu0 %v584, 122
    %v610 = vpop.permute.xlu0 %609
    %611 = vrot.lane.b32.xlu0 %v585, 122
    %v612 = vpop.permute.xlu0 %611
    %613 = vrot.lane.b32.xlu0 %v586, 122
    %v614 = vpop.permute.xlu0 %613
    %615 = vrot.lane.b32.xlu0 %v587, 122
    %v616 = vpop.permute.xlu0 %615
    %617 = vrot.lane.b32.xlu0 %v588, 122
    %v618 = vpop.permute.xlu0 %617
    %619 = vrot.lane.b32.xlu0 %v589, 122
    %v620 = vpop.permute.xlu0 %619
    %621 = vrot.lane.b32.xlu0 %v590, 122
    %v622 = vpop.permute.xlu0 %621
    %623 = vrot.lane.b32.xlu0 %v591, 122
    %v624 = vpop.permute.xlu0 %623
    %625 = vrot.lane.b32.xlu0 %v592, 122
    %v626 = vpop.permute.xlu0 %625
    %627 = vrot.lane.b32.xlu0 %v593, 122
    %v628 = vpop.permute.xlu0 %627
    %629 = vrot.lane.b32.xlu0 %v594, 122
    %v630 = vpop.permute.xlu0 %629
    %vm631 = vcmask 998400
    %v632 = vsel %vm631, %v608, %v610
    %v633 = vsel %vm631, %v610, %v612
    %v634 = vsel %vm631, %v612, %v614
    %v635 = vsel %vm631, %v614, %v616
    %v636 = vsel %vm631, %v616, %v618
    %v637 = vsel %vm631, %v620, %v622
    %v638 = vsel %vm631, %v622, %v624
    %v639 = vsel %vm631, %v624, %v626
    %v640 = vsel %vm631, %v626, %v628
    %v641 = vsel %vm631, %v628, %v630
    %v652 = vadd.f32 %v569, %v632
    %v653 = vadd.f32 %v570, %v633
    %v654 = vadd.f32 %v571, %v634
    %v655 = vadd.f32 %v572, %v635
    %v656 = vadd.f32 %v573, %v636
    %v657 = vadd.f32 %v574, %v637
    %v658 = vadd.f32 %v575, %v638
    %v659 = vadd.f32 %v576, %v639
    %v660 = vadd.f32 %v577, %v640
    %v661 = vadd.f32 %v578, %v641
    %662 = vset.pattern.permute.xlu0 13
    %663 = vperm.xlu0 %662, %v54
    %v664 = vpop.permute.xlu0 %663
    %v666 = vmul.f32 %v664, %v468
    %v667 = vmul.f32 %v664, %v469
    %v668 = vmul.f32 %v664, %v470
    %v669 = vmul.f32 %v664, %v471
    %v670 = vmul.f32 %v664, %v472
    %v671 = vmul.f32 %v664, %v473
    %v672 = vmul.f32 %v664, %v475
    %v673 = vmul.f32 %v664, %v476
    %v674 = vmul.f32 %v664, %v477
    %v675 = vmul.f32 %v664, %v478
    %v676 = vmul.f32 %v664, %v479
    %v677 = vmul.f32 %v664, %v480
    %690 = vrot.lane.b32.xlu0 %v666, 56
    %v691 = vpop.permute.xlu0 %690
    %692 = vrot.lane.b32.xlu0 %v667, 56
    %v693 = vpop.permute.xlu0 %692
    %694 = vrot.lane.b32.xlu0 %v668, 56
    %v695 = vpop.permute.xlu0 %694
    %696 = vrot.lane.b32.xlu0 %v669, 56
    %v697 = vpop.permute.xlu0 %696
    %698 = vrot.lane.b32.xlu0 %v670, 56
    %v699 = vpop.permute.xlu0 %698
    %700 = vrot.lane.b32.xlu0 %v671, 56
    %v701 = vpop.permute.xlu0 %700
    %702 = vrot.lane.b32.xlu0 %v672, 56
    %v703 = vpop.permute.xlu0 %702
    %704 = vrot.lane.b32.xlu0 %v673, 56
    %v705 = vpop.permute.xlu0 %704
    %706 = vrot.lane.b32.xlu0 %v674, 56
    %v707 = vpop.permute.xlu0 %706
    %708 = vrot.lane.b32.xlu0 %v675, 56
    %v709 = vpop.permute.xlu0 %708
    %710 = vrot.lane.b32.xlu0 %v676, 56
    %v711 = vpop.permute.xlu0 %710
    %712 = vrot.lane.b32.xlu0 %v677, 56
    %v713 = vpop.permute.xlu0 %712
    %vm714 = vcmask 457728
    %v715 = vsel %vm714, %v691, %v693
    %v716 = vsel %vm714, %v693, %v695
    %v717 = vsel %vm714, %v695, %v697
    %v718 = vsel %vm714, %v697, %v699
    %v719 = vsel %vm714, %v699, %v701
    %v720 = vsel %vm714, %v703, %v705
    %v721 = vsel %vm714, %v705, %v707
    %v722 = vsel %vm714, %v707, %v709
    %v723 = vsel %vm714, %v709, %v711
    %v724 = vsel %vm714, %v711, %v713
    %v735 = vadd.f32 %v652, %v715
    %v736 = vadd.f32 %v653, %v716
    %v737 = vadd.f32 %v654, %v717
    %v738 = vadd.f32 %v655, %v718
    %v739 = vadd.f32 %v656, %v719
    %v740 = vadd.f32 %v657, %v720
    %v741 = vadd.f32 %v658, %v721
    %v742 = vadd.f32 %v659, %v722
    %v743 = vadd.f32 %v660, %v723
    %v744 = vadd.f32 %v661, %v724
    %745 = vset.pattern.permute.xlu0 14
    %746 = vperm.xlu0 %745, %v54
    %v747 = vpop.permute.xlu0 %746
    %v749 = vmul.f32 %v747, %v468
    %v750 = vmul.f32 %v747, %v469
    %v751 = vmul.f32 %v747, %v470
    %v752 = vmul.f32 %v747, %v471
    %v753 = vmul.f32 %v747, %v472
    %v754 = vmul.f32 %v747, %v473
    %v755 = vmul.f32 %v747, %v475
    %v756 = vmul.f32 %v747, %v476
    %v757 = vmul.f32 %v747, %v477
    %v758 = vmul.f32 %v747, %v478
    %v759 = vmul.f32 %v747, %v479
    %v760 = vmul.f32 %v747, %v480
    %773 = vrot.lane.b32.xlu0 %v749, 53
    %v774 = vpop.permute.xlu0 %773
    %775 = vrot.lane.b32.xlu0 %v750, 53
    %v776 = vpop.permute.xlu0 %775
    %777 = vrot.lane.b32.xlu0 %v751, 53
    %v778 = vpop.permute.xlu0 %777
    %779 = vrot.lane.b32.xlu0 %v752, 53
    %v780 = vpop.permute.xlu0 %779
    %781 = vrot.lane.b32.xlu0 %v753, 53
    %v782 = vpop.permute.xlu0 %781
    %783 = vrot.lane.b32.xlu0 %v754, 53
    %v784 = vpop.permute.xlu0 %783
    %785 = vrot.lane.b32.xlu0 %v755, 53
    %v786 = vpop.permute.xlu0 %785
    %787 = vrot.lane.b32.xlu0 %v756, 53
    %v788 = vpop.permute.xlu0 %787
    %789 = vrot.lane.b32.xlu0 %v757, 53
    %v790 = vpop.permute.xlu0 %789
    %791 = vrot.lane.b32.xlu0 %v758, 53
    %v792 = vpop.permute.xlu0 %791
    %793 = vrot.lane.b32.xlu0 %v759, 53
    %v794 = vpop.permute.xlu0 %793
    %795 = vrot.lane.b32.xlu0 %v760, 53
    %v796 = vpop.permute.xlu0 %795
    %vm797 = vcmask 433152
    %v798 = vsel %vm797, %v774, %v776
    %v799 = vsel %vm797, %v776, %v778
    %v800 = vsel %vm797, %v778, %v780
    %v801 = vsel %vm797, %v780, %v782
    %v802 = vsel %vm797, %v782, %v784
    %v803 = vsel %vm797, %v786, %v788
    %v804 = vsel %vm797, %v788, %v790
    %v805 = vsel %vm797, %v790, %v792
    %v806 = vsel %vm797, %v792, %v794
    %v807 = vsel %vm797, %v794, %v796
    %v818 = vadd.f32 %v735, %v798
    %v819 = vadd.f32 %v736, %v799
    %v820 = vadd.f32 %v737, %v800
    %v821 = vadd.f32 %v738, %v801
    %v822 = vadd.f32 %v739, %v802
    %v823 = vadd.f32 %v740, %v803
    %v824 = vadd.f32 %v741, %v804
    %v825 = vadd.f32 %v742, %v805
    %v826 = vadd.f32 %v743, %v806
    %v827 = vadd.f32 %v744, %v807
    %828 = vset.pattern.permute.xlu0 15
    %829 = vperm.xlu0 %828, %v54
    %v830 = vpop.permute.xlu0 %829
    %v832 = vmul.f32 %v830, %v468
    %v833 = vmul.f32 %v830, %v469
    %v834 = vmul.f32 %v830, %v470
    %v835 = vmul.f32 %v830, %v471
    %v836 = vmul.f32 %v830, %v472
    %v837 = vmul.f32 %v830, %v473
    %v838 = vmul.f32 %v830, %v475
    %v839 = vmul.f32 %v830, %v476
    %v840 = vmul.f32 %v830, %v477
    %v841 = vmul.f32 %v830, %v478
    %v842 = vmul.f32 %v830, %v479
    %v843 = vmul.f32 %v830, %v480
    %856 = vrot.lane.b32.xlu0 %v832, 50
    %v857 = vpop.permute.xlu0 %856
    %858 = vrot.lane.b32.xlu0 %v833, 50
    %v859 = vpop.permute.xlu0 %858
    %860 = vrot.lane.b32.xlu0 %v834, 50
    %v861 = vpop.permute.xlu0 %860
    %862 = vrot.lane.b32.xlu0 %v835, 50
    %v863 = vpop.permute.xlu0 %862
    %864 = vrot.lane.b32.xlu0 %v836, 50
    %v865 = vpop.permute.xlu0 %864
    %866 = vrot.lane.b32.xlu0 %v837, 50
    %v867 = vpop.permute.xlu0 %866
    %868 = vrot.lane.b32.xlu0 %v838, 50
    %v869 = vpop.permute.xlu0 %868
    %870 = vrot.lane.b32.xlu0 %v839, 50
    %v871 = vpop.permute.xlu0 %870
    %872 = vrot.lane.b32.xlu0 %v840, 50
    %v873 = vpop.permute.xlu0 %872
    %874 = vrot.lane.b32.xlu0 %v841, 50
    %v875 = vpop.permute.xlu0 %874
    %876 = vrot.lane.b32.xlu0 %v842, 50
    %v877 = vpop.permute.xlu0 %876
    %878 = vrot.lane.b32.xlu0 %v843, 50
    %v879 = vpop.permute.xlu0 %878
    %vm880 = vcmask 408576
    %v881 = vsel %vm880, %v857, %v859
    %v882 = vsel %vm880, %v859, %v861
    %v883 = vsel %vm880, %v861, %v863
    %v884 = vsel %vm880, %v863, %v865
    %v885 = vsel %vm880, %v865, %v867
    %v886 = vsel %vm880, %v869, %v871
    %v887 = vsel %vm880, %v871, %v873
    %v888 = vsel %vm880, %v873, %v875
    %v889 = vsel %vm880, %v875, %v877
    %v890 = vsel %vm880, %v877, %v879
    %v901 = vadd.f32 %v818, %v881
    %v902 = vadd.f32 %v819, %v882
    %v903 = vadd.f32 %v820, %v883
    %v904 = vadd.f32 %v821, %v884
    %v905 = vadd.f32 %v822, %v885
    %v906 = vadd.f32 %v823, %v886
    %v907 = vadd.f32 %v824, %v887
    %v908 = vadd.f32 %v825, %v888
    %v909 = vadd.f32 %v826, %v889
    %v910 = vadd.f32 %v827, %v890
    %911 = vset.pattern.permute.xlu0 16
    %912 = vperm.xlu0 %911, %v54
    %v913 = vpop.permute.xlu0 %912
    %v915 = vmul.f32 %v913, %v469
    %v916 = vmul.f32 %v913, %v470
    %v917 = vmul.f32 %v913, %v471
    %v918 = vmul.f32 %v913, %v472
    %v919 = vmul.f32 %v913, %v473
    %v920 = vmul.f32 %v913, %v474
    %v921 = vmul.f32 %v913, %v476
    %v922 = vmul.f32 %v913, %v477
    %v923 = vmul.f32 %v913, %v478
    %v924 = vmul.f32 %v913, %v479
    %v925 = vmul.f32 %v913, %v480
    %v926 = vmul.f32 %v913, %v481
    %939 = vrot.lane.b32.xlu0 %v915, 112
    %v940 = vpop.permute.xlu0 %939
    %941 = vrot.lane.b32.xlu0 %v916, 112
    %v942 = vpop.permute.xlu0 %941
    %943 = vrot.lane.b32.xlu0 %v917, 112
    %v944 = vpop.permute.xlu0 %943
    %945 = vrot.lane.b32.xlu0 %v918, 112
    %v946 = vpop.permute.xlu0 %945
    %947 = vrot.lane.b32.xlu0 %v919, 112
    %v948 = vpop.permute.xlu0 %947
    %949 = vrot.lane.b32.xlu0 %v920, 112
    %v950 = vpop.permute.xlu0 %949
    %951 = vrot.lane.b32.xlu0 %v921, 112
    %v952 = vpop.permute.xlu0 %951
    %953 = vrot.lane.b32.xlu0 %v922, 112
    %v954 = vpop.permute.xlu0 %953
    %955 = vrot.lane.b32.xlu0 %v923, 112
    %v956 = vpop.permute.xlu0 %955
    %957 = vrot.lane.b32.xlu0 %v924, 112
    %v958 = vpop.permute.xlu0 %957
    %959 = vrot.lane.b32.xlu0 %v925, 112
    %v960 = vpop.permute.xlu0 %959
    %961 = vrot.lane.b32.xlu0 %v926, 112
    %v962 = vpop.permute.xlu0 %961
    %vm963 = vcmask 916480
    %v964 = vsel %vm963, %v940, %v942
    %v965 = vsel %vm963, %v942, %v944
    %v966 = vsel %vm963, %v944, %v946
    %v967 = vsel %vm963, %v946, %v948
    %v968 = vsel %vm963, %v948, %v950
    %v969 = vsel %vm963, %v952, %v954
    %v970 = vsel %vm963, %v954, %v956
    %v971 = vsel %vm963, %v956, %v958
    %v972 = vsel %vm963, %v958, %v960
    %v973 = vsel %vm963, %v960, %v962
    %v984 = vadd.f32 %v901, %v964
    %v985 = vadd.f32 %v902, %v965
    %v986 = vadd.f32 %v903, %v966
    %v987 = vadd.f32 %v904, %v967
    %v988 = vadd.f32 %v905, %v968
    %v989 = vadd.f32 %v906, %v969
    %v990 = vadd.f32 %v907, %v970
    %v991 = vadd.f32 %v908, %v971
    %v992 = vadd.f32 %v909, %v972
    %v993 = vadd.f32 %v910, %v973
    %994 = vset.pattern.permute.xlu0 17
    %995 = vperm.xlu0 %994, %v54
    %v996 = vpop.permute.xlu0 %995
    %v998 = vmul.f32 %v996, %v469
    %v999 = vmul.f32 %v996, %v470
    %v1000 = vmul.f32 %v996, %v471
    %v1001 = vmul.f32 %v996, %v472
    %v1002 = vmul.f32 %v996, %v473
    %v1003 = vmul.f32 %v996, %v474
    %v1004 = vmul.f32 %v996, %v476
    %v1005 = vmul.f32 %v996, %v477
    %v1006 = vmul.f32 %v996, %v478
    %v1007 = vmul.f32 %v996, %v479
    %v1008 = vmul.f32 %v996, %v480
    %v1009 = vmul.f32 %v996, %v481
    %1022 = vrot.lane.b32.xlu0 %v998, 109
    %v1023 = vpop.permute.xlu0 %1022
    %1024 = vrot.lane.b32.xlu0 %v999, 109
    %v1025 = vpop.permute.xlu0 %1024
    %1026 = vrot.lane.b32.xlu0 %v1000, 109
    %v1027 = vpop.permute.xlu0 %1026
    %1028 = vrot.lane.b32.xlu0 %v1001, 109
    %v1029 = vpop.permute.xlu0 %1028
    %1030 = vrot.lane.b32.xlu0 %v1002, 109
    %v1031 = vpop.permute.xlu0 %1030
    %1032 = vrot.lane.b32.xlu0 %v1003, 109
    %v1033 = vpop.permute.xlu0 %1032
    %1034 = vrot.lane.b32.xlu0 %v1004, 109
    %v1035 = vpop.permute.xlu0 %1034
    %1036 = vrot.lane.b32.xlu0 %v1005, 109
    %v1037 = vpop.permute.xlu0 %1036
    %1038 = vrot.lane.b32.xlu0 %v1006, 109
    %v1039 = vpop.permute.xlu0 %1038
    %1040 = vrot.lane.b32.xlu0 %v1007, 109
    %v1041 = vpop.permute.xlu0 %1040
    %1042 = vrot.lane.b32.xlu0 %v1008, 109
    %v1043 = vpop.permute.xlu0 %1042
    %1044 = vrot.lane.b32.xlu0 %v1009, 109
    %v1045 = vpop.permute.xlu0 %1044
    %vm1046 = vcmask 891904
    %v1047 = vsel %vm1046, %v1023, %v1025
    %v1048 = vsel %vm1046, %v1025, %v1027
    %v1049 = vsel %vm1046, %v1027, %v1029
    %v1050 = vsel %vm1046, %v1029, %v1031
    %v1051 = vsel %vm1046, %v1031, %v1033
    %v1052 = vsel %vm1046, %v1035, %v1037
    %v1053 = vsel %vm1046, %v1037, %v1039
    %v1054 = vsel %vm1046, %v1039, %v1041
    %v1055 = vsel %vm1046, %v1041, %v1043
    %v1056 = vsel %vm1046, %v1043, %v1045
    %v1067 = vadd.f32 %v984, %v1047
    %v1068 = vadd.f32 %v985, %v1048
    %v1069 = vadd.f32 %v986, %v1049
    %v1070 = vadd.f32 %v987, %v1050
    %v1071 = vadd.f32 %v988, %v1051
    %v1072 = vadd.f32 %v989, %v1052
    %v1073 = vadd.f32 %v990, %v1053
    %v1074 = vadd.f32 %v991, %v1054
    %v1075 = vadd.f32 %v992, %v1055
    %v1076 = vadd.f32 %v993, %v1056
    %1077 = vset.pattern.permute.xlu0 18
    %1078 = vperm.xlu0 %1077, %v54
    %v1079 = vpop.permute.xlu0 %1078
    %v1081 = vmul.f32 %v1079, %v469
    %v1082 = vmul.f32 %v1079, %v470
    %v1083 = vmul.f32 %v1079, %v471
    %v1084 = vmul.f32 %v1079, %v472
    %v1085 = vmul.f32 %v1079, %v473
    %v1086 = vmul.f32 %v1079, %v474
    %v1087 = vmul.f32 %v1079, %v476
    %v1088 = vmul.f32 %v1079, %v477
    %v1089 = vmul.f32 %v1079, %v478
    %v1090 = vmul.f32 %v1079, %v479
    %v1091 = vmul.f32 %v1079, %v480
    %v1092 = vmul.f32 %v1079, %v481
    %1105 = vrot.lane.b32.xlu0 %v1081, 106
    %v1106 = vpop.permute.xlu0 %1105
    %1107 = vrot.lane.b32.xlu0 %v1082, 106
    %v1108 = vpop.permute.xlu0 %1107
    %1109 = vrot.lane.b32.xlu0 %v1083, 106
    %v1110 = vpop.permute.xlu0 %1109
    %1111 = vrot.lane.b32.xlu0 %v1084, 106
    %v1112 = vpop.permute.xlu0 %1111
    %1113 = vrot.lane.b32.xlu0 %v1085, 106
    %v1114 = vpop.permute.xlu0 %1113
    %1115 = vrot.lane.b32.xlu0 %v1086, 106
    %v1116 = vpop.permute.xlu0 %1115
    %1117 = vrot.lane.b32.xlu0 %v1087, 106
    %v1118 = vpop.permute.xlu0 %1117
    %1119 = vrot.lane.b32.xlu0 %v1088, 106
    %v1120 = vpop.permute.xlu0 %1119
    %1121 = vrot.lane.b32.xlu0 %v1089, 106
    %v1122 = vpop.permute.xlu0 %1121
    %1123 = vrot.lane.b32.xlu0 %v1090, 106
    %v1124 = vpop.permute.xlu0 %1123
    %1125 = vrot.lane.b32.xlu0 %v1091, 106
    %v1126 = vpop.permute.xlu0 %1125
    %1127 = vrot.lane.b32.xlu0 %v1092, 106
    %v1128 = vpop.permute.xlu0 %1127
    %vm1129 = vcmask 867328
    %v1130 = vsel %vm1129, %v1106, %v1108
    %v1131 = vsel %vm1129, %v1108, %v1110
    %v1132 = vsel %vm1129, %v1110, %v1112
    %v1133 = vsel %vm1129, %v1112, %v1114
    %v1134 = vsel %vm1129, %v1114, %v1116
    %v1135 = vsel %vm1129, %v1118, %v1120
    %v1136 = vsel %vm1129, %v1120, %v1122
    %v1137 = vsel %vm1129, %v1122, %v1124
    %v1138 = vsel %vm1129, %v1124, %v1126
    %v1139 = vsel %vm1129, %v1126, %v1128
    %v1150 = vadd.f32 %v1067, %v1130
    %v1151 = vadd.f32 %v1068, %v1131
    %v1152 = vadd.f32 %v1069, %v1132
    %v1153 = vadd.f32 %v1070, %v1133
    %v1154 = vadd.f32 %v1071, %v1134
    %v1155 = vadd.f32 %v1072, %v1135
    %v1156 = vadd.f32 %v1073, %v1136
    %v1157 = vadd.f32 %v1074, %v1137
    %v1158 = vadd.f32 %v1075, %v1138
    %v1159 = vadd.f32 %v1076, %v1139
    %1160 = vset.pattern.permute.xlu0 19
    %1161 = vperm.xlu0 %1160, %v54
    %v1162 = vpop.permute.xlu0 %1161
    %v1164 = vadd.f32 %v1150, %v1162
    %v1165 = vadd.f32 %v1151, %v1162
    %v1166 = vadd.f32 %v1152, %v1162
    %v1167 = vadd.f32 %v1153, %v1162
    %v1168 = vadd.f32 %v1154, %v1162
    %v1169 = vadd.f32 %v1155, %v1162
    %v1170 = vadd.f32 %v1156, %v1162
    %v1171 = vadd.f32 %v1157, %v1162
    %v1172 = vadd.f32 %v1158, %v1162
    %v1173 = vadd.f32 %v1159, %v1162
    %s1174 = scalar_lea.vmem [#allocation5], 42
    %v1175 = vld [vmem:[%s1174] ss:$8 sm:$0xf]
    %v1176 = vld [vmem:[%s1174] ss:$8 sm:$0x10]
    %v1177 = vor.u32 %v1175, %v1176
    %v1179 = vlaneseq
    %v1180 = vshrl.u32 %v1179, 7
    %v1181 = vsub.s32 0, %v1180
    %v1182 = vrot.slane %v1177, %v1181
    %v1183 = vlaneseq
    %v1184 = vshrl.u32 %v1183, 7
    %v1185 = vsub.s32 1, %v1184
    %v1186 = vrot.slane %v1177, %v1185
    %v1187 = vlaneseq
    %v1188 = vshrl.u32 %v1187, 7
    %v1189 = vsub.s32 2, %v1188
    %v1190 = vrot.slane %v1177, %v1189
    %v1191 = vlaneseq
    %v1192 = vshrl.u32 %v1191, 7
    %v1193 = vsub.s32 3, %v1192
    %v1194 = vrot.slane %v1177, %v1193
    %v1195 = vlaneseq
    %v1196 = vshrl.u32 %v1195, 7
    %v1197 = vsub.s32 4, %v1196
    %v1198 = vrot.slane %v1177, %v1197
    %v1204 = vmul.f32 %v1164, %v1182
    %v1205 = vmul.f32 %v1165, %v1186
    %v1206 = vmul.f32 %v1166, %v1190
    %v1207 = vmul.f32 %v1167, %v1194
    %v1208 = vmul.f32 %v1168, %v1198
    %v1209 = vmul.f32 %v1169, %v1182
    %v1210 = vmul.f32 %v1170, %v1186
    %v1211 = vmul.f32 %v1171, %v1190
    %v1212 = vmul.f32 %v1172, %v1194
    %v1213 = vmul.f32 %v1173, %v1198
    %v1214 = vadd.f32 %v1204, %v1205
    %v1215 = vadd.f32 %v1214, %v1206
    %v1216 = vadd.f32 %v1215, %v1207
    %v1217 = vadd.f32 %v1216, %v1208
    %1218 = vadd.xlane.f32.xlu0 %v1217
    %v1219 = vpop.xlane.xlu0 %1218
    %v1220 = vadd.f32 %v1209, %v1210
    %v1221 = vadd.f32 %v1220, %v1211
    %v1222 = vadd.f32 %v1221, %v1212
    %v1223 = vadd.f32 %v1222, %v1213
    %1224 = vadd.xlane.f32.xlu0 %v1223
    %v1225 = vpop.xlane.xlu0 %1224
    %v1226 = vmul.f32 %v1219, 0.00390625
    %v1227 = vmul.f32 %v1225, 0.00390625
    %v1228 = vsub.f32 %v1164, %v1226
    %v1229 = vsub.f32 %v1165, %v1226
    %v1230 = vsub.f32 %v1166, %v1226
    %v1231 = vsub.f32 %v1167, %v1226
    %v1232 = vsub.f32 %v1168, %v1226
    %v1233 = vsub.f32 %v1169, %v1227
    %v1234 = vsub.f32 %v1170, %v1227
    %v1235 = vsub.f32 %v1171, %v1227
    %v1236 = vsub.f32 %v1172, %v1227
    %v1237 = vsub.f32 %v1173, %v1227
    %v1238 = vmul.f32 %v1228, %v1182
    %v1239 = vmul.f32 %v1229, %v1186
    %v1240 = vmul.f32 %v1230, %v1190
    %v1241 = vmul.f32 %v1231, %v1194
    %v1242 = vmul.f32 %v1232, %v1198
    %v1243 = vmul.f32 %v1233, %v1182
    %v1244 = vmul.f32 %v1234, %v1186
    %v1245 = vmul.f32 %v1235, %v1190
    %v1246 = vmul.f32 %v1236, %v1194
    %v1247 = vmul.f32 %v1237, %v1198
    %v1248 = vmul.f32 %v1238, %v1238
    %v1249 = vmul.f32 %v1239, %v1239
    %v1250 = vmul.f32 %v1240, %v1240
    %v1251 = vmul.f32 %v1241, %v1241
    %v1252 = vmul.f32 %v1242, %v1242
    %v1253 = vmul.f32 %v1243, %v1243
    %v1254 = vmul.f32 %v1244, %v1244
    %v1255 = vmul.f32 %v1245, %v1245
    %v1256 = vmul.f32 %v1246, %v1246
    %v1257 = vmul.f32 %v1247, %v1247
    %v1258 = vadd.f32 %v1248, %v1249
    %v1259 = vadd.f32 %v1258, %v1250
    %v1260 = vadd.f32 %v1259, %v1251
    %v1261 = vadd.f32 %v1260, %v1252
    %1262 = vadd.xlane.f32.xlu0 %v1261
    %v1263 = vpop.xlane.xlu0 %1262
    %v1264 = vadd.f32 %v1253, %v1254
    %v1265 = vadd.f32 %v1264, %v1255
    %v1266 = vadd.f32 %v1265, %v1256
    %v1267 = vadd.f32 %v1266, %v1257
    %1268 = vadd.xlane.f32.xlu0 %v1267
    %v1269 = vpop.xlane.xlu0 %1268
    %v1270 = vmul.f32 %v1263, 0.00390625
    %v1271 = vmul.f32 %v1269, 0.00390625
    %s1272 = scalar_lea.vmem [#allocation5], 40
    %v1273 = vld [vmem:[%s1272] ss:$8 sm:$0xf]
    %v1274 = vld [vmem:[%s1272] ss:$8 sm:$0x10]
    %v1275 = vor.u32 %v1273, %v1274
    %s1276 = scalar_lea.vmem [#allocation5], 41
    %v1277 = vld [vmem:[%s1276] ss:$8 sm:$0xf]
    %v1278 = vld [vmem:[%s1276] ss:$8 sm:$0x10]
    %v1279 = vor.u32 %v1277, %v1278
    %v1280 = vadd.f32 %v1270, 1e-05
    %v1281 = vadd.f32 %v1271, 1e-05
    %v1282 = vrsqrt.pop %v1280
    %v1283 = vrsqrt.pop %v1281
    %v1284 = vmul.f32 %v1228, %v1282
    %v1285 = vmul.f32 %v1229, %v1282
    %v1286 = vmul.f32 %v1230, %v1282
    %v1287 = vmul.f32 %v1231, %v1282
    %v1288 = vmul.f32 %v1232, %v1282
    %v1289 = vmul.f32 %v1233, %v1283
    %v1290 = vmul.f32 %v1234, %v1283
    %v1291 = vmul.f32 %v1235, %v1283
    %v1292 = vmul.f32 %v1236, %v1283
    %v1293 = vmul.f32 %v1237, %v1283
    %v1295 = vlaneseq
    %v1296 = vshrl.u32 %v1295, 7
    %v1297 = vsub.s32 0, %v1296
    %v1298 = vrot.slane %v1275, %v1297
    %v1299 = vlaneseq
    %v1300 = vshrl.u32 %v1299, 7
    %v1301 = vsub.s32 1, %v1300
    %v1302 = vrot.slane %v1275, %v1301
    %v1303 = vlaneseq
    %v1304 = vshrl.u32 %v1303, 7
    %v1305 = vsub.s32 2, %v1304
    %v1306 = vrot.slane %v1275, %v1305
    %v1307 = vlaneseq
    %v1308 = vshrl.u32 %v1307, 7
    %v1309 = vsub.s32 3, %v1308
    %v1310 = vrot.slane %v1275, %v1309
    %v1311 = vlaneseq
    %v1312 = vshrl.u32 %v1311, 7
    %v1313 = vsub.s32 4, %v1312
    %v1314 = vrot.slane %v1275, %v1313
    %v1320 = vmul.f32 %v1284, %v1298
    %v1321 = vmul.f32 %v1285, %v1302
    %v1322 = vmul.f32 %v1286, %v1306
    %v1323 = vmul.f32 %v1287, %v1310
    %v1324 = vmul.f32 %v1288, %v1314
    %v1325 = vmul.f32 %v1289, %v1298
    %v1326 = vmul.f32 %v1290, %v1302
    %v1327 = vmul.f32 %v1291, %v1306
    %v1328 = vmul.f32 %v1292, %v1310
    %v1329 = vmul.f32 %v1293, %v1314
    %v1331 = vlaneseq
    %v1332 = vshrl.u32 %v1331, 7
    %v1333 = vsub.s32 0, %v1332
    %v1334 = vrot.slane %v1279, %v1333
    %v1335 = vlaneseq
    %v1336 = vshrl.u32 %v1335, 7
    %v1337 = vsub.s32 1, %v1336
    %v1338 = vrot.slane %v1279, %v1337
    %v1339 = vlaneseq
    %v1340 = vshrl.u32 %v1339, 7
    %v1341 = vsub.s32 2, %v1340
    %v1342 = vrot.slane %v1279, %v1341
    %v1343 = vlaneseq
    %v1344 = vshrl.u32 %v1343, 7
    %v1345 = vsub.s32 3, %v1344
    %v1346 = vrot.slane %v1279, %v1345
    %v1347 = vlaneseq
    %v1348 = vshrl.u32 %v1347, 7
    %v1349 = vsub.s32 4, %v1348
    %v1350 = vrot.slane %v1279, %v1349
    %v1356 = vadd.f32 %v1320, %v1334
    %v1357 = vadd.f32 %v1321, %v1338
    %v1358 = vadd.f32 %v1322, %v1342
    %v1359 = vadd.f32 %v1323, %v1346
    %v1360 = vadd.f32 %v1324, %v1350
    %v1361 = vadd.f32 %v1325, %v1334
    %v1362 = vadd.f32 %v1326, %v1338
    %v1363 = vadd.f32 %v1327, %v1342
    %v1364 = vadd.f32 %v1328, %v1346
    %v1365 = vadd.f32 %v1329, %v1350
    %v1366 = vld [vmem:[#allocation5 + $0x50] sm:$0xff]
    %v1367 = vld [vmem:[#allocation5 + $0x78] sm:$0xff]
    %1369 = vset.pattern.permute.xlu0 8
    %1370 = vperm.xlu0 %1369, %v1366
    %v1371 = vpop.permute.xlu0 %1370
    %1374 = vset.pattern.permute.xlu0 8
    %1375 = vperm.xlu0 %1374, %v1367
    %v1376 = vpop.permute.xlu0 %1375
    %vm1378 = vcmask 64512
    %v1379 = vsel %vm1378, %v1366, 0
    %v1381 = vsel %vm1378, %v1367, 0
    %1383 = vmatprep.subr.mxu0 %v1357
    %1384 = vmatpush1.msra.mxu0 %v1356
    %1385 = vmatprep.subr.mxu0 0.0
    %1386 = vmatpush1.msra.mxu0 0.0
    %1387 = vmatprep.subr.mxu0 0.0
    %1388 = vmatpush1.msra.mxu0 0.0
    %1389 = vmatprep.subr.mxu0 0.0
    %1390 = vmatpush1.msra.mxu0 0.0
    %1391 = vmatprep.subr.mxu0 0.0
    %1392 = vmatpush1.msra.mxu0 0.0
    %1393 = vmatprep.subr.mxu0 0.0
    %1394 = vmatpush1.msra.mxu0 0.0
    %1395 = vmatprep.subr.mxu0 0.0
    %1396 = vmatpush1.msra.mxu0 0.0
    %1397 = vmatprep.subr.mxu0 0.0
    %1398 = vmatpush1.msra.mxu0 0.0
    %1399 = vmatprep.subr.mxu0 0.0
    %1400 = vmatpush1.msra.mxu0 0.0
    %1401 = vmatprep.subr.mxu0 0.0
    %1402 = vmatpush1.msra.mxu0 0.0
    %1403 = vmatprep.subr.mxu0 0.0
    %1404 = vmatpush1.msra.mxu0 0.0
    %1405 = vmatprep.subr.mxu0 0.0
    %1406 = vmatpush1.msra.mxu0 0.0
    %1407 = vmatprep.subr.mxu0 0.0
    %1408 = vmatpush1.msra.mxu0 0.0
    %1409 = vmatprep.subr.mxu0 0.0
    %1410 = vmatpush1.msra.mxu0 0.0
    %1411 = vmatprep.subr.mxu0 0.0
    %1412 = vmatpush1.msra.mxu0 0.0
    %1413 = vmatprep.subr.mxu0 0.0
    %1414 = vmatpush1.msra.mxu0 0.0
    %1415 = vmatprep.subr.mxu0 0.0
    %1416 = vmatpush1.msra.mxu0 0.0
    %1417 = vmatprep.subr.mxu0 0.0
    %1418 = vmatpush1.msra.mxu0 0.0
    %1419 = vmatprep.subr.mxu0 0.0
    %1420 = vmatpush1.msra.mxu0 0.0
    %1421 = vmatprep.subr.mxu0 0.0
    %1422 = vmatpush1.msra.mxu0 0.0
    %1423 = vmatprep.subr.mxu0 0.0
    %1424 = vmatpush1.msra.mxu0 0.0
    %1425 = vmatprep.subr.mxu0 0.0
    %1426 = vmatpush1.msra.mxu0 0.0
    %1427 = vmatprep.subr.mxu0 0.0
    %1428 = vmatpush1.msra.mxu0 0.0
    %1429 = vmatprep.subr.mxu0 0.0
    %1430 = vmatpush1.msra.mxu0 0.0
    %1431 = vmatprep.subr.mxu0 0.0
    %1432 = vmatpush1.msra.mxu0 0.0
    %1433 = vmatprep.subr.mxu0 0.0
    %1434 = vmatpush1.msra.mxu0 0.0
    %1435 = vmatprep.subr.mxu0 0.0
    %1436 = vmatpush1.msra.mxu0 0.0
    %1437 = vmatprep.subr.mxu0 0.0
    %1438 = vmatpush1.msra.mxu0 0.0
    %1439 = vmatprep.subr.mxu0 0.0
    %1440 = vmatpush1.msra.mxu0 0.0
    %1441 = vmatprep.subr.mxu0 0.0
    %1442 = vmatpush1.msra.mxu0 0.0
    %1443 = vmatprep.subr.mxu0 0.0
    %1444 = vmatpush1.msra.mxu0 0.0
    %1445 = vmatprep.subr.mxu0 0.0
    %1446 = vmatpush1.msra.mxu0 0.0
    %1447 = vmatprep.mubr.f32.mxu0 0.0
    %1448 = vmatmul.mubr.f32.gmra.mrb[0].mxu0 %v1379
    %v1449 = vpop.f32.mrb[0].mxu0
    %v1450 = vadd.f32 %v1371, %v1449
    %v1451 = vpop.f32.mrb[0].mxu0
    %v1452 = vadd.f32 %v1371, %v1451
    %1453 = vmatprep.mubr.f32.mxu0 0.0
    %1454 = vmatmul.mubr.f32.gmra.mrb[0].mxu0 %v1381
    %v1455 = vpop.f32.mrb[0].mxu0
    %v1456 = vadd.f32 %v1376, %v1455
    %v1457 = vpop.f32.mrb[0].mxu0
    %v1458 = vadd.f32 %v1376, %v1457
    %1459 = vdwg.mxu0
    %1460 = vmatprep.subr.mxu0 %v1359
    %1461 = vmatpush1.msra.mxu0 %v1358
    %1462 = vmatprep.subr.mxu0 0.0
    %1463 = vmatpush1.msra.mxu0 0.0
    %1464 = vmatprep.subr.mxu0 0.0
    %1465 = vmatpush1.msra.mxu0 0.0
    %1466 = vmatprep.subr.mxu0 0.0
    %1467 = vmatpush1.msra.mxu0 0.0
    %1468 = vmatprep.subr.mxu0 0.0
    %1469 = vmatpush1.msra.mxu0 0.0
    %1470 = vmatprep.subr.mxu0 0.0
    %1471 = vmatpush1.msra.mxu0 0.0
    %1472 = vmatprep.subr.mxu0 0.0
    %1473 = vmatpush1.msra.mxu0 0.0
    %1474 = vmatprep.subr.mxu0 0.0
    %1475 = vmatpush1.msra.mxu0 0.0
    %1476 = vmatprep.subr.mxu0 0.0
    %1477 = vmatpush1.msra.mxu0 0.0
    %1478 = vmatprep.subr.mxu0 0.0
    %1479 = vmatpush1.msra.mxu0 0.0
    %1480 = vmatprep.subr.mxu0 0.0
    %1481 = vmatpush1.msra.mxu0 0.0
    %1482 = vmatprep.subr.mxu0 0.0
    %1483 = vmatpush1.msra.mxu0 0.0
    %1484 = vmatprep.subr.mxu0 0.0
    %1485 = vmatpush1.msra.mxu0 0.0
    %1486 = vmatprep.subr.mxu0 0.0
    %1487 = vmatpush1.msra.mxu0 0.0
    %1488 = vmatprep.subr.mxu0 0.0
    %1489 = vmatpush1.msra.mxu0 0.0
    %1490 = vmatprep.subr.mxu0 0.0
    %1491 = vmatpush1.msra.mxu0 0.0
    %1492 = vmatprep.subr.mxu0 0.0
    %1493 = vmatpush1.msra.mxu0 0.0
    %1494 = vmatprep.subr.mxu0 0.0
    %1495 = vmatpush1.msra.mxu0 0.0
    %1496 = vmatprep.subr.mxu0 0.0
    %1497 = vmatpush1.msra.mxu0 0.0
    %1498 = vmatprep.subr.mxu0 0.0
    %1499 = vmatpush1.msra.mxu0 0.0
    %1500 = vmatprep.subr.mxu0 0.0
    %1501 = vmatpush1.msra.mxu0 0.0
    %1502 = vmatprep.subr.mxu0 0.0
    %1503 = vmatpush1.msra.mxu0 0.0
    %1504 = vmatprep.subr.mxu0 0.0
    %1505 = vmatpush1.msra.mxu0 0.0
    %1506 = vmatprep.subr.mxu0 0.0
    %1507 = vmatpush1.msra.mxu0 0.0
    %1508 = vmatprep.subr.mxu0 0.0
    %1509 = vmatpush1.msra.mxu0 0.0
    %1510 = vmatprep.subr.mxu0 0.0
    %1511 = vmatpush1.msra.mxu0 0.0
    %1512 = vmatprep.subr.mxu0 0.0
    %1513 = vmatpush1.msra.mxu0 0.0
    %1514 = vmatprep.subr.mxu0 0.0
    %1515 = vmatpush1.msra.mxu0 0.0
    %1516 = vmatprep.subr.mxu0 0.0
    %1517 = vmatpush1.msra.mxu0 0.0
    %1518 = vmatprep.subr.mxu0 0.0
    %1519 = vmatpush1.msra.mxu0 0.0
    %1520 = vmatprep.subr.mxu0 0.0
    %1521 = vmatpush1.msra.mxu0 0.0
    %1522 = vmatprep.subr.mxu0 0.0
    %1523 = vmatpush1.msra.mxu0 0.0
    %1524 = vmatprep.mubr.f32.mxu0 0.0
    %1525 = vmatmul.mubr.f32.gmra.mrb[0].mxu0 %v1379
    %v1526 = vpop.f32.mrb[0].mxu0
    %v1527 = vadd.f32 %v1371, %v1526
    %v1528 = vpop.f32.mrb[0].mxu0
    %v1529 = vadd.f32 %v1371, %v1528
    %1530 = vmatprep.mubr.f32.mxu0 0.0
    %1531 = vmatmul.mubr.f32.gmra.mrb[0].mxu0 %v1381
    %v1532 = vpop.f32.mrb[0].mxu0
    %v1533 = vadd.f32 %v1376, %v1532
    %v1534 = vpop.f32.mrb[0].mxu0
    %v1535 = vadd.f32 %v1376, %v1534
    %1536 = vdwg.mxu0
    %1537 = vmatprep.subr.mxu0 %v1361
    %1538 = vmatpush1.msra.mxu0 %v1360
    %1539 = vmatprep.subr.mxu0 0.0
    %1540 = vmatpush1.msra.mxu0 0.0
    %1541 = vmatprep.subr.mxu0 0.0
    %1542 = vmatpush1.msra.mxu0 0.0
    %1543 = vmatprep.subr.mxu0 0.0
    %1544 = vmatpush1.msra.mxu0 0.0
    %1545 = vmatprep.subr.mxu0 0.0
    %1546 = vmatpush1.msra.mxu0 0.0
    %1547 = vmatprep.subr.mxu0 0.0
    %1548 = vmatpush1.msra.mxu0 0.0
    %1549 = vmatprep.subr.mxu0 0.0
    %1550 = vmatpush1.msra.mxu0 0.0
    %1551 = vmatprep.subr.mxu0 0.0
    %1552 = vmatpush1.msra.mxu0 0.0
    %1553 = vmatprep.subr.mxu0 0.0
    %1554 = vmatpush1.msra.mxu0 0.0
    %1555 = vmatprep.subr.mxu0 0.0
    %1556 = vmatpush1.msra.mxu0 0.0
    %1557 = vmatprep.subr.mxu0 0.0
    %1558 = vmatpush1.msra.mxu0 0.0
    %1559 = vmatprep.subr.mxu0 0.0
    %1560 = vmatpush1.msra.mxu0 0.0
    %1561 = vmatprep.subr.mxu0 0.0
    %1562 = vmatpush1.msra.mxu0 0.0
    %1563 = vmatprep.subr.mxu0 0.0
    %1564 = vmatpush1.msra.mxu0 0.0
    %1565 = vmatprep.subr.mxu0 0.0
    %1566 = vmatpush1.msra.mxu0 0.0
    %1567 = vmatprep.subr.mxu0 0.0
    %1568 = vmatpush1.msra.mxu0 0.0
    %1569 = vmatprep.subr.mxu0 0.0
    %1570 = vmatpush1.msra.mxu0 0.0
    %1571 = vmatprep.subr.mxu0 0.0
    %1572 = vmatpush1.msra.mxu0 0.0
    %1573 = vmatprep.subr.mxu0 0.0
    %1574 = vmatpush1.msra.mxu0 0.0
    %1575 = vmatprep.subr.mxu0 0.0
    %1576 = vmatpush1.msra.mxu0 0.0
    %1577 = vmatprep.subr.mxu0 0.0
    %1578 = vmatpush1.msra.mxu0 0.0
    %1579 = vmatprep.subr.mxu0 0.0
    %1580 = vmatpush1.msra.mxu0 0.0
    %1581 = vmatprep.subr.mxu0 0.0
    %1582 = vmatpush1.msra.mxu0 0.0
    %1583 = vmatprep.subr.mxu0 0.0
    %1584 = vmatpush1.msra.mxu0 0.0
    %1585 = vmatprep.subr.mxu0 0.0
    %1586 = vmatpush1.msra.mxu0 0.0
    %1587 = vmatprep.subr.mxu0 0.0
    %1588 = vmatpush1.msra.mxu0 0.0
    %1589 = vmatprep.subr.mxu0 0.0
    %1590 = vmatpush1.msra.mxu0 0.0
    %1591 = vmatprep.subr.mxu0 0.0
    %1592 = vmatpush1.msra.mxu0 0.0
    %1593 = vmatprep.subr.mxu0 0.0
    %1594 = vmatpush1.msra.mxu0 0.0
    %1595 = vmatprep.subr.mxu0 0.0
    %1596 = vmatpush1.msra.mxu0 0.0
    %1597 = vmatprep.subr.mxu0 0.0
    %1598 = vmatpush1.msra.mxu0 0.0
    %1599 = vmatprep.subr.mxu0 0.0
    %1600 = vmatpush1.msra.mxu0 0.0
    %1601 = vmatprep.mubr.f32.mxu0 0.0
    %1602 = vmatmul.mubr.f32.gmra.mrb[0].mxu0 %v1379
    %v1603 = vpop.f32.mrb[0].mxu0
    %v1604 = vadd.f32 %v1371, %v1603
    %v1605 = vpop.f32.mrb[0].mxu0
    %v1606 = vadd.f32 %v1371, %v1605
    %1607 = vmatprep.mubr.f32.mxu0 0.0
    %1608 = vmatmul.mubr.f32.gmra.mrb[0].mxu0 %v1381
    %v1609 = vpop.f32.mrb[0].mxu0
    %v1610 = vadd.f32 %v1376, %v1609
    %v1611 = vpop.f32.mrb[0].mxu0
    %v1612 = vadd.f32 %v1376, %v1611
    %1613 = vdwg.mxu0
    %1614 = vmatprep.subr.mxu0 %v1363
    %1615 = vmatpush1.msra.mxu0 %v1362
    %1616 = vmatprep.subr.mxu0 0.0
    %1617 = vmatpush1.msra.mxu0 0.0
    %1618 = vmatprep.subr.mxu0 0.0
    %1619 = vmatpush1.msra.mxu0 0.0
    %1620 = vmatprep.subr.mxu0 0.0
    %1621 = vmatpush1.msra.mxu0 0.0
    %1622 = vmatprep.subr.mxu0 0.0
    %1623 = vmatpush1.msra.mxu0 0.0
    %1624 = vmatprep.subr.mxu0 0.0
    %1625 = vmatpush1.msra.mxu0 0.0
    %1626 = vmatprep.subr.mxu0 0.0
    %1627 = vmatpush1.msra.mxu0 0.0
    %1628 = vmatprep.subr.mxu0 0.0
    %1629 = vmatpush1.msra.mxu0 0.0
    %1630 = vmatprep.subr.mxu0 0.0
    %1631 = vmatpush1.msra.mxu0 0.0
    %1632 = vmatprep.subr.mxu0 0.0
    %1633 = vmatpush1.msra.mxu0 0.0
    %1634 = vmatprep.subr.mxu0 0.0
    %1635 = vmatpush1.msra.mxu0 0.0
    %1636 = vmatprep.subr.mxu0 0.0
    %1637 = vmatpush1.msra.mxu0 0.0
    %1638 = vmatprep.subr.mxu0 0.0
    %1639 = vmatpush1.msra.mxu0 0.0
    %1640 = vmatprep.subr.mxu0 0.0
    %1641 = vmatpush1.msra.mxu0 0.0
    %1642 = vmatprep.subr.mxu0 0.0
    %1643 = vmatpush1.msra.mxu0 0.0
    %1644 = vmatprep.subr.mxu0 0.0
    %1645 = vmatpush1.msra.mxu0 0.0
    %1646 = vmatprep.subr.mxu0 0.0
    %1647 = vmatpush1.msra.mxu0 0.0
    %1648 = vmatprep.subr.mxu0 0.0
    %1649 = vmatpush1.msra.mxu0 0.0
    %1650 = vmatprep.subr.mxu0 0.0
    %1651 = vmatpush1.msra.mxu0 0.0
    %1652 = vmatprep.subr.mxu0 0.0
    %1653 = vmatpush1.msra.mxu0 0.0
    %1654 = vmatprep.subr.mxu0 0.0
    %1655 = vmatpush1.msra.mxu0 0.0
    %1656 = vmatprep.subr.mxu0 0.0
    %1657 = vmatpush1.msra.mxu0 0.0
    %1658 = vmatprep.subr.mxu0 0.0
    %1659 = vmatpush1.msra.mxu0 0.0
    %1660 = vmatprep.subr.mxu0 0.0
    %1661 = vmatpush1.msra.mxu0 0.0
    %1662 = vmatprep.subr.mxu0 0.0
    %1663 = vmatpush1.msra.mxu0 0.0
    %1664 = vmatprep.subr.mxu0 0.0
    %1665 = vmatpush1.msra.mxu0 0.0
    %1666 = vmatprep.subr.mxu0 0.0
    %1667 = vmatpush1.msra.mxu0 0.0
    %1668 = vmatprep.subr.mxu0 0.0
    %1669 = vmatpush1.msra.mxu0 0.0
    %1670 = vmatprep.subr.mxu0 0.0
    %1671 = vmatpush1.msra.mxu0 0.0
    %1672 = vmatprep.subr.mxu0 0.0
    %1673 = vmatpush1.msra.mxu0 0.0
    %1674 = vmatprep.subr.mxu0 0.0
    %1675 = vmatpush1.msra.mxu0 0.0
    %1676 = vmatprep.subr.mxu0 0.0
    %1677 = vmatpush1.msra.mxu0 0.0
    %1678 = vmatprep.mubr.f32.mxu0 0.0
    %1679 = vmatmul.mubr.f32.gmra.mrb[0].mxu0 %v1379
    %v1680 = vpop.f32.mrb[0].mxu0
    %v1681 = vadd.f32 %v1371, %v1680
    %v1682 = vpop.f32.mrb[0].mxu0
    %v1683 = vadd.f32 %v1371, %v1682
    %1684 = vmatprep.mubr.f32.mxu0 0.0
    %1685 = vmatmul.mubr.f32.gmra.mrb[0].mxu0 %v1381
    %v1686 = vpop.f32.mrb[0].mxu0
    %v1687 = vadd.f32 %v1376, %v1686
    %v1688 = vpop.f32.mrb[0].mxu0
    %v1689 = vadd.f32 %v1376, %v1688
    %1690 = vdwg.mxu0
    %1691 = vmatprep.subr.mxu0 %v1365
    %1692 = vmatpush1.msra.mxu0 %v1364
    %1693 = vmatprep.subr.mxu0 0.0
    %1694 = vmatpush1.msra.mxu0 0.0
    %1695 = vmatprep.subr.mxu0 0.0
    %1696 = vmatpush1.msra.mxu0 0.0
    %1697 = vmatprep.subr.mxu0 0.0
    %1698 = vmatpush1.msra.mxu0 0.0
    %1699 = vmatprep.subr.mxu0 0.0
    %1700 = vmatpush1.msra.mxu0 0.0
    %1701 = vmatprep.subr.mxu0 0.0
    %1702 = vmatpush1.msra.mxu0 0.0
    %1703 = vmatprep.subr.mxu0 0.0
    %1704 = vmatpush1.msra.mxu0 0.0
    %1705 = vmatprep.subr.mxu0 0.0
    %1706 = vmatpush1.msra.mxu0 0.0
    %1707 = vmatprep.subr.mxu0 0.0
    %1708 = vmatpush1.msra.mxu0 0.0
    %1709 = vmatprep.subr.mxu0 0.0
    %1710 = vmatpush1.msra.mxu0 0.0
    %1711 = vmatprep.subr.mxu0 0.0
    %1712 = vmatpush1.msra.mxu0 0.0
    %1713 = vmatprep.subr.mxu0 0.0
    %1714 = vmatpush1.msra.mxu0 0.0
    %1715 = vmatprep.subr.mxu0 0.0
    %1716 = vmatpush1.msra.mxu0 0.0
    %1717 = vmatprep.subr.mxu0 0.0
    %1718 = vmatpush1.msra.mxu0 0.0
    %1719 = vmatprep.subr.mxu0 0.0
    %1720 = vmatpush1.msra.mxu0 0.0
    %1721 = vmatprep.subr.mxu0 0.0
    %1722 = vmatpush1.msra.mxu0 0.0
    %1723 = vmatprep.subr.mxu0 0.0
    %1724 = vmatpush1.msra.mxu0 0.0
    %1725 = vmatprep.subr.mxu0 0.0
    %1726 = vmatpush1.msra.mxu0 0.0
    %1727 = vmatprep.subr.mxu0 0.0
    %1728 = vmatpush1.msra.mxu0 0.0
    %1729 = vmatprep.subr.mxu0 0.0
    %1730 = vmatpush1.msra.mxu0 0.0
    %1731 = vmatprep.subr.mxu0 0.0
    %1732 = vmatpush1.msra.mxu0 0.0
    %1733 = vmatprep.subr.mxu0 0.0
    %1734 = vmatpush1.msra.mxu0 0.0
    %1735 = vmatprep.subr.mxu0 0.0
    %1736 = vmatpush1.msra.mxu0 0.0
    %1737 = vmatprep.subr.mxu0 0.0
    %1738 = vmatpush1.msra.mxu0 0.0
    %1739 = vmatprep.subr.mxu0 0.0
    %1740 = vmatpush1.msra.mxu0 0.0
    %1741 = vmatprep.subr.mxu0 0.0
    %1742 = vmatpush1.msra.mxu0 0.0
    %1743 = vmatprep.subr.mxu0 0.0
    %1744 = vmatpush1.msra.mxu0 0.0
    %1745 = vmatprep.subr.mxu0 0.0
    %1746 = vmatpush1.msra.mxu0 0.0
    %1747 = vmatprep.subr.mxu0 0.0
    %1748 = vmatpush1.msra.mxu0 0.0
    %1749 = vmatprep.subr.mxu0 0.0
    %1750 = vmatpush1.msra.mxu0 0.0
    %1751 = vmatprep.subr.mxu0 0.0
    %1752 = vmatpush1.msra.mxu0 0.0
    %1753 = vmatprep.subr.mxu0 0.0
    %1754 = vmatpush1.msra.mxu0 0.0
    %1755 = vmatprep.mubr.f32.mxu0 0.0
    %1756 = vmatmul.mubr.f32.gmra.mrb[0].mxu0 %v1379
    %v1757 = vpop.f32.mrb[0].mxu0
    %v1758 = vadd.f32 %v1371, %v1757
    %v1759 = vpop.f32.mrb[0].mxu0
    %v1760 = vadd.f32 %v1371, %v1759
    %1761 = vmatprep.mubr.f32.mxu0 0.0
    %1762 = vmatmul.mubr.f32.gmra.mrb[0].mxu0 %v1381
    %v1763 = vpop.f32.mrb[0].mxu0
    %v1764 = vadd.f32 %v1376, %v1763
    %v1765 = vpop.f32.mrb[0].mxu0
    %v1766 = vadd.f32 %v1376, %v1765
    %1767 = vdwg.mxu0
    %v1768 = vmul.f32 %v1450, 0.5
    %v1769 = vmul.f32 %v1452, 0.5
    %v1770 = vmul.f32 %v1527, 0.5
    %v1771 = vmul.f32 %v1529, 0.5
    %v1772 = vmul.f32 %v1604, 0.5
    %v1773 = vmul.f32 %v1606, 0.5
    %v1774 = vmul.f32 %v1681, 0.5
    %v1775 = vmul.f32 %v1683, 0.5
    %v1776 = vmul.f32 %v1758, 0.5
    %v1777 = vmul.f32 %v1760, 0.5
    %v1778 = vmul.f32 %v1456, 0.5
    %v1779 = vmul.f32 %v1458, 0.5
    %v1780 = vmul.f32 %v1533, 0.5
    %v1781 = vmul.f32 %v1535, 0.5
    %v1782 = vmul.f32 %v1610, 0.5
    %v1783 = vmul.f32 %v1612, 0.5
    %v1784 = vmul.f32 %v1687, 0.5
    %v1785 = vmul.f32 %v1689, 0.5
    %v1786 = vmul.f32 %v1764, 0.5
    %v1787 = vmul.f32 %v1766, 0.5
    %v1788 = vmul.f32 %v1450, 0.70710677
    %v1789 = vmul.f32 %v1452, 0.70710677
    %v1790 = vmul.f32 %v1527, 0.70710677
    %v1791 = vmul.f32 %v1529, 0.70710677
    %v1792 = vmul.f32 %v1604, 0.70710677
    %v1793 = vmul.f32 %v1606, 0.70710677
    %v1794 = vmul.f32 %v1681, 0.70710677
    %v1795 = vmul.f32 %v1683, 0.70710677
    %v1796 = vmul.f32 %v1758, 0.70710677
    %v1797 = vmul.f32 %v1760, 0.70710677
    %v1798 = vmul.f32 %v1456, 0.70710677
    %v1799 = vmul.f32 %v1458, 0.70710677
    %v1800 = vmul.f32 %v1533, 0.70710677
    %v1801 = vmul.f32 %v1535, 0.70710677
    %v1802 = vmul.f32 %v1610, 0.70710677
    %v1803 = vmul.f32 %v1612, 0.70710677
    %v1804 = vmul.f32 %v1687, 0.70710677
    %v1805 = vmul.f32 %v1689, 0.70710677
    %v1806 = vmul.f32 %v1764, 0.70710677
    %v1807 = vmul.f32 %v1766, 0.70710677
    %v1808 = verf.f32.pop %v1788
    %v1809 = verf.f32.pop %v1789
    %v1810 = verf.f32.pop %v1790
    %v1811 = verf.f32.pop %v1791
    %v1812 = verf.f32.pop %v1792
    %v1813 = verf.f32.pop %v1793
    %v1814 = verf.f32.pop %v1794
    %v1815 = verf.f32.pop %v1795
    %v1816 = verf.f32.pop %v1796
    %v1817 = verf.f32.pop %v1797
    %v1818 = verf.f32.pop %v1798
    %v1819 = verf.f32.pop %v1799
    %v1820 = verf.f32.pop %v1800
    %v1821 = verf.f32.pop %v1801
    %v1822 = verf.f32.pop %v1802
    %v1823 = verf.f32.pop %v1803
    %v1824 = verf.f32.pop %v1804
    %v1825 = verf.f32.pop %v1805
    %v1826 = verf.f32.pop %v1806
    %v1827 = verf.f32.pop %v1807
    %v1828 = vadd.f32 %v1808, 1.0
    %v1829 = vadd.f32 %v1809, 1.0
    %v1830 = vadd.f32 %v1810, 1.0
    %v1831 = vadd.f32 %v1811, 1.0
    %v1832 = vadd.f32 %v1812, 1.0
    %v1833 = vadd.f32 %v1813, 1.0
    %v1834 = vadd.f32 %v1814, 1.0
    %v1835 = vadd.f32 %v1815, 1.0
    %v1836 = vadd.f32 %v1816, 1.0
    %v1837 = vadd.f32 %v1817, 1.0
    %v1838 = vadd.f32 %v1818, 1.0
    %v1839 = vadd.f32 %v1819, 1.0
    %v1840 = vadd.f32 %v1820, 1.0
    %v1841 = vadd.f32 %v1821, 1.0
    %v1842 = vadd.f32 %v1822, 1.0
    %v1843 = vadd.f32 %v1823, 1.0
    %v1844 = vadd.f32 %v1824, 1.0
    %v1845 = vadd.f32 %v1825, 1.0
    %v1846 = vadd.f32 %v1826, 1.0
    %v1847 = vadd.f32 %v1827, 1.0
    %v1848 = vmul.f32 %v1768, %v1828
    %v1849 = vmul.f32 %v1769, %v1829
    %v1850 = vmul.f32 %v1770, %v1830
    %v1851 = vmul.f32 %v1771, %v1831
    %v1852 = vmul.f32 %v1772, %v1832
    %v1853 = vmul.f32 %v1773, %v1833
    %v1854 = vmul.f32 %v1774, %v1834
    %v1855 = vmul.f32 %v1775, %v1835
    %v1856 = vmul.f32 %v1776, %v1836
    %v1857 = vmul.f32 %v1777, %v1837
    %v1858 = vmul.f32 %v1778, %v1838
    %v1859 = vmul.f32 %v1779, %v1839
    %v1860 = vmul.f32 %v1780, %v1840
    %v1861 = vmul.f32 %v1781, %v1841
    %v1862 = vmul.f32 %v1782, %v1842
    %v1863 = vmul.f32 %v1783, %v1843
    %v1864 = vmul.f32 %v1784, %v1844
    %v1865 = vmul.f32 %v1785, %v1845
    %v1866 = vmul.f32 %v1786, %v1846
    %v1867 = vmul.f32 %v1787, %v1847
    %v1868 = vld [vmem:[#allocation5 + $0xa0] sm:$0xff]
    %1870 = vset.pattern.permute.xlu0 16
    %1871 = vperm.xlu0 %1870, %v1868
    %v1872 = vpop.permute.xlu0 %1871
    %vm1874 = vcmask 130048
    %v1875 = vsel %vm1874, %v1868, 0
    %1877 = vmatprep.subr.mxu0 %v1849
    %1878 = vmatpush1.msra.mxu0 %v1848
    %1879 = vmatprep.subr.mxu0 %v1859
    %1880 = vmatpush1.msra.mxu0 %v1858
    %1881 = vmatprep.subr.mxu0 0.0
    %1882 = vmatpush1.msra.mxu0 0.0
    %1883 = vmatprep.subr.mxu0 0.0
    %1884 = vmatpush1.msra.mxu0 0.0
    %1885 = vmatprep.subr.mxu0 0.0
    %1886 = vmatpush1.msra.mxu0 0.0
    %1887 = vmatprep.subr.mxu0 0.0
    %1888 = vmatpush1.msra.mxu0 0.0
    %1889 = vmatprep.subr.mxu0 0.0
    %1890 = vmatpush1.msra.mxu0 0.0
    %1891 = vmatprep.subr.mxu0 0.0
    %1892 = vmatpush1.msra.mxu0 0.0
    %1893 = vmatprep.subr.mxu0 0.0
    %1894 = vmatpush1.msra.mxu0 0.0
    %1895 = vmatprep.subr.mxu0 0.0
    %1896 = vmatpush1.msra.mxu0 0.0
    %1897 = vmatprep.subr.mxu0 0.0
    %1898 = vmatpush1.msra.mxu0 0.0
    %1899 = vmatprep.subr.mxu0 0.0
    %1900 = vmatpush1.msra.mxu0 0.0
    %1901 = vmatprep.subr.mxu0 0.0
    %1902 = vmatpush1.msra.mxu0 0.0
    %1903 = vmatprep.subr.mxu0 0.0
    %1904 = vmatpush1.msra.mxu0 0.0
    %1905 = vmatprep.subr.mxu0 0.0
    %1906 = vmatpush1.msra.mxu0 0.0
    %1907 = vmatprep.subr.mxu0 0.0
    %1908 = vmatpush1.msra.mxu0 0.0
    %1909 = vmatprep.subr.mxu0 0.0
    %1910 = vmatpush1.msra.mxu0 0.0
    %1911 = vmatprep.subr.mxu0 0.0
    %1912 = vmatpush1.msra.mxu0 0.0
    %1913 = vmatprep.subr.mxu0 0.0
    %1914 = vmatpush1.msra.mxu0 0.0
    %1915 = vmatprep.subr.mxu0 0.0
    %1916 = vmatpush1.msra.mxu0 0.0
    %1917 = vmatprep.subr.mxu0 0.0
    %1918 = vmatpush1.msra.mxu0 0.0
    %1919 = vmatprep.subr.mxu0 0.0
    %1920 = vmatpush1.msra.mxu0 0.0
    %1921 = vmatprep.subr.mxu0 0.0
    %1922 = vmatpush1.msra.mxu0 0.0
    %1923 = vmatprep.subr.mxu0 0.0
    %1924 = vmatpush1.msra.mxu0 0.0
    %1925 = vmatprep.subr.mxu0 0.0
    %1926 = vmatpush1.msra.mxu0 0.0
    %1927 = vmatprep.subr.mxu0 0.0
    %1928 = vmatpush1.msra.mxu0 0.0
    %1929 = vmatprep.subr.mxu0 0.0
    %1930 = vmatpush1.msra.mxu0 0.0
    %1931 = vmatprep.subr.mxu0 0.0
    %1932 = vmatpush1.msra.mxu0 0.0
    %1933 = vmatprep.subr.mxu0 0.0
    %1934 = vmatpush1.msra.mxu0 0.0
    %1935 = vmatprep.subr.mxu0 0.0
    %1936 = vmatpush1.msra.mxu0 0.0
    %1937 = vmatprep.subr.mxu0 0.0
    %1938 = vmatpush1.msra.mxu0 0.0
    %1939 = vmatprep.subr.mxu0 0.0
    %1940 = vmatpush1.msra.mxu0 0.0
    %1941 = vmatprep.mubr.f32.mxu0 0.0
    %1942 = vmatmul.mubr.f32.gmra.mrb[0].mxu0 %v1875
    %v1943 = vpop.f32.mrb[0].mxu0
    %v1944 = vadd.f32 %v1872, %v1943
    %v1945 = vpop.f32.mrb[0].mxu0
    %v1946 = vadd.f32 %v1872, %v1945
    %1947 = vdwg.mxu0
    %1948 = vmatprep.subr.mxu0 %v1851
    %1949 = vmatpush1.msra.mxu0 %v1850
    %1950 = vmatprep.subr.mxu0 %v1861
    %1951 = vmatpush1.msra.mxu0 %v1860
    %1952 = vmatprep.subr.mxu0 0.0
    %1953 = vmatpush1.msra.mxu0 0.0
    %1954 = vmatprep.subr.mxu0 0.0
    %1955 = vmatpush1.msra.mxu0 0.0
    %1956 = vmatprep.subr.mxu0 0.0
    %1957 = vmatpush1.msra.mxu0 0.0
    %1958 = vmatprep.subr.mxu0 0.0
    %1959 = vmatpush1.msra.mxu0 0.0
    %1960 = vmatprep.subr.mxu0 0.0
    %1961 = vmatpush1.msra.mxu0 0.0
    %1962 = vmatprep.subr.mxu0 0.0
    %1963 = vmatpush1.msra.mxu0 0.0
    %1964 = vmatprep.subr.mxu0 0.0
    %1965 = vmatpush1.msra.mxu0 0.0
    %1966 = vmatprep.subr.mxu0 0.0
    %1967 = vmatpush1.msra.mxu0 0.0
    %1968 = vmatprep.subr.mxu0 0.0
    %1969 = vmatpush1.msra.mxu0 0.0
    %1970 = vmatprep.subr.mxu0 0.0
    %1971 = vmatpush1.msra.mxu0 0.0
    %1972 = vmatprep.subr.mxu0 0.0
    %1973 = vmatpush1.msra.mxu0 0.0
    %1974 = vmatprep.subr.mxu0 0.0
    %1975 = vmatpush1.msra.mxu0 0.0
    %1976 = vmatprep.subr.mxu0 0.0
    %1977 = vmatpush1.msra.mxu0 0.0
    %1978 = vmatprep.subr.mxu0 0.0
    %1979 = vmatpush1.msra.mxu0 0.0
    %1980 = vmatprep.subr.mxu0 0.0
    %1981 = vmatpush1.msra.mxu0 0.0
    %1982 = vmatprep.subr.mxu0 0.0
    %1983 = vmatpush1.msra.mxu0 0.0
    %1984 = vmatprep.subr.mxu0 0.0
    %1985 = vmatpush1.msra.mxu0 0.0
    %1986 = vmatprep.subr.mxu0 0.0
    %1987 = vmatpush1.msra.mxu0 0.0
    %1988 = vmatprep.subr.mxu0 0.0
    %1989 = vmatpush1.msra.mxu0 0.0
    %1990 = vmatprep.subr.mxu0 0.0
    %1991 = vmatpush1.msra.mxu0 0.0
    %1992 = vmatprep.subr.mxu0 0.0
    %1993 = vmatpush1.msra.mxu0 0.0
    %1994 = vmatprep.subr.mxu0 0.0
    %1995 = vmatpush1.msra.mxu0 0.0
    %1996 = vmatprep.subr.mxu0 0.0
    %1997 = vmatpush1.msra.mxu0 0.0
    %1998 = vmatprep.subr.mxu0 0.0
    %1999 = vmatpush1.msra.mxu0 0.0
    %2000 = vmatprep.subr.mxu0 0.0
    %2001 = vmatpush1.msra.mxu0 0.0
    %2002 = vmatprep.subr.mxu0 0.0
    %2003 = vmatpush1.msra.mxu0 0.0
    %2004 = vmatprep.subr.mxu0 0.0
    %2005 = vmatpush1.msra.mxu0 0.0
    %2006 = vmatprep.subr.mxu0 0.0
    %2007 = vmatpush1.msra.mxu0 0.0
    %2008 = vmatprep.subr.mxu0 0.0
    %2009 = vmatpush1.msra.mxu0 0.0
    %2010 = vmatprep.subr.mxu0 0.0
    %2011 = vmatpush1.msra.mxu0 0.0
    %2012 = vmatprep.mubr.f32.mxu0 0.0
    %2013 = vmatmul.mubr.f32.gmra.mrb[0].mxu0 %v1875
    %v2014 = vpop.f32.mrb[0].mxu0
    %v2015 = vadd.f32 %v1872, %v2014
    %v2016 = vpop.f32.mrb[0].mxu0
    %v2017 = vadd.f32 %v1872, %v2016
    %2018 = vdwg.mxu0
    %2019 = vmatprep.subr.mxu0 %v1853
    %2020 = vmatpush1.msra.mxu0 %v1852
    %2021 = vmatprep.subr.mxu0 %v1863
    %2022 = vmatpush1.msra.mxu0 %v1862
    %2023 = vmatprep.subr.mxu0 0.0
    %2024 = vmatpush1.msra.mxu0 0.0
    %2025 = vmatprep.subr.mxu0 0.0
    %2026 = vmatpush1.msra.mxu0 0.0
    %2027 = vmatprep.subr.mxu0 0.0
    %2028 = vmatpush1.msra.mxu0 0.0
    %2029 = vmatprep.subr.mxu0 0.0
    %2030 = vmatpush1.msra.mxu0 0.0
    %2031 = vmatprep.subr.mxu0 0.0
    %2032 = vmatpush1.msra.mxu0 0.0
    %2033 = vmatprep.subr.mxu0 0.0
    %2034 = vmatpush1.msra.mxu0 0.0
    %2035 = vmatprep.subr.mxu0 0.0
    %2036 = vmatpush1.msra.mxu0 0.0
    %2037 = vmatprep.subr.mxu0 0.0
    %2038 = vmatpush1.msra.mxu0 0.0
    %2039 = vmatprep.subr.mxu0 0.0
    %2040 = vmatpush1.msra.mxu0 0.0
    %2041 = vmatprep.subr.mxu0 0.0
    %2042 = vmatpush1.msra.mxu0 0.0
    %2043 = vmatprep.subr.mxu0 0.0
    %2044 = vmatpush1.msra.mxu0 0.0
    %2045 = vmatprep.subr.mxu0 0.0
    %2046 = vmatpush1.msra.mxu0 0.0
    %2047 = vmatprep.subr.mxu0 0.0
    %2048 = vmatpush1.msra.mxu0 0.0
    %2049 = vmatprep.subr.mxu0 0.0
    %2050 = vmatpush1.msra.mxu0 0.0
    %2051 = vmatprep.subr.mxu0 0.0
    %2052 = vmatpush1.msra.mxu0 0.0
    %2053 = vmatprep.subr.mxu0 0.0
    %2054 = vmatpush1.msra.mxu0 0.0
    %2055 = vmatprep.subr.mxu0 0.0
    %2056 = vmatpush1.msra.mxu0 0.0
    %2057 = vmatprep.subr.mxu0 0.0
    %2058 = vmatpush1.msra.mxu0 0.0
    %2059 = vmatprep.subr.mxu0 0.0
    %2060 = vmatpush1.msra.mxu0 0.0
    %2061 = vmatprep.subr.mxu0 0.0
    %2062 = vmatpush1.msra.mxu0 0.0
    %2063 = vmatprep.subr.mxu0 0.0
    %2064 = vmatpush1.msra.mxu0 0.0
    %2065 = vmatprep.subr.mxu0 0.0
    %2066 = vmatpush1.msra.mxu0 0.0
    %2067 = vmatprep.subr.mxu0 0.0
    %2068 = vmatpush1.msra.mxu0 0.0
    %2069 = vmatprep.subr.mxu0 0.0
    %2070 = vmatpush1.msra.mxu0 0.0
    %2071 = vmatprep.subr.mxu0 0.0
    %2072 = vmatpush1.msra.mxu0 0.0
    %2073 = vmatprep.subr.mxu0 0.0
    %2074 = vmatpush1.msra.mxu0 0.0
    %2075 = vmatprep.subr.mxu0 0.0
    %2076 = vmatpush1.msra.mxu0 0.0
    %2077 = vmatprep.subr.mxu0 0.0
    %2078 = vmatpush1.msra.mxu0 0.0
    %2079 = vmatprep.subr.mxu0 0.0
    %2080 = vmatpush1.msra.mxu0 0.0
    %2081 = vmatprep.subr.mxu0 0.0
    %2082 = vmatpush1.msra.mxu0 0.0
    %2083 = vmatprep.mubr.f32.mxu0 0.0
    %2084 = vmatmul.mubr.f32.gmra.mrb[0].mxu0 %v1875
    %v2085 = vpop.f32.mrb[0].mxu0
    %v2086 = vadd.f32 %v1872, %v2085
    %v2087 = vpop.f32.mrb[0].mxu0
    %v2088 = vadd.f32 %v1872, %v2087
    %2089 = vdwg.mxu0
    %2090 = vmatprep.subr.mxu0 %v1855
    %2091 = vmatpush1.msra.mxu0 %v1854
    %2092 = vmatprep.subr.mxu0 %v1865
    %2093 = vmatpush1.msra.mxu0 %v1864
    %2094 = vmatprep.subr.mxu0 0.0
    %2095 = vmatpush1.msra.mxu0 0.0
    %2096 = vmatprep.subr.mxu0 0.0
    %2097 = vmatpush1.msra.mxu0 0.0
    %2098 = vmatprep.subr.mxu0 0.0
    %2099 = vmatpush1.msra.mxu0 0.0
    %2100 = vmatprep.subr.mxu0 0.0
    %2101 = vmatpush1.msra.mxu0 0.0
    %2102 = vmatprep.subr.mxu0 0.0
    %2103 = vmatpush1.msra.mxu0 0.0
    %2104 = vmatprep.subr.mxu0 0.0
    %2105 = vmatpush1.msra.mxu0 0.0
    %2106 = vmatprep.subr.mxu0 0.0
    %2107 = vmatpush1.msra.mxu0 0.0
    %2108 = vmatprep.subr.mxu0 0.0
    %2109 = vmatpush1.msra.mxu0 0.0
    %2110 = vmatprep.subr.mxu0 0.0
    %2111 = vmatpush1.msra.mxu0 0.0
    %2112 = vmatprep.subr.mxu0 0.0
    %2113 = vmatpush1.msra.mxu0 0.0
    %2114 = vmatprep.subr.mxu0 0.0
    %2115 = vmatpush1.msra.mxu0 0.0
    %2116 = vmatprep.subr.mxu0 0.0
    %2117 = vmatpush1.msra.mxu0 0.0
    %2118 = vmatprep.subr.mxu0 0.0
    %2119 = vmatpush1.msra.mxu0 0.0
    %2120 = vmatprep.subr.mxu0 0.0
    %2121 = vmatpush1.msra.mxu0 0.0
    %2122 = vmatprep.subr.mxu0 0.0
    %2123 = vmatpush1.msra.mxu0 0.0
    %2124 = vmatprep.subr.mxu0 0.0
    %2125 = vmatpush1.msra.mxu0 0.0
    %2126 = vmatprep.subr.mxu0 0.0
    %2127 = vmatpush1.msra.mxu0 0.0
    %2128 = vmatprep.subr.mxu0 0.0
    %2129 = vmatpush1.msra.mxu0 0.0
    %2130 = vmatprep.subr.mxu0 0.0
    %2131 = vmatpush1.msra.mxu0 0.0
    %2132 = vmatprep.subr.mxu0 0.0
    %2133 = vmatpush1.msra.mxu0 0.0
    %2134 = vmatprep.subr.mxu0 0.0
    %2135 = vmatpush1.msra.mxu0 0.0
    %2136 = vmatprep.subr.mxu0 0.0
    %2137 = vmatpush1.msra.mxu0 0.0
    %2138 = vmatprep.subr.mxu0 0.0
    %2139 = vmatpush1.msra.mxu0 0.0
    %2140 = vmatprep.subr.mxu0 0.0
    %2141 = vmatpush1.msra.mxu0 0.0
    %2142 = vmatprep.subr.mxu0 0.0
    %2143 = vmatpush1.msra.mxu0 0.0
    %2144 = vmatprep.subr.mxu0 0.0
    %2145 = vmatpush1.msra.mxu0 0.0
    %2146 = vmatprep.subr.mxu0 0.0
    %2147 = vmatpush1.msra.mxu0 0.0
    %2148 = vmatprep.subr.mxu0 0.0
    %2149 = vmatpush1.msra.mxu0 0.0
    %2150 = vmatprep.subr.mxu0 0.0
    %2151 = vmatpush1.msra.mxu0 0.0
    %2152 = vmatprep.subr.mxu0 0.0
    %2153 = vmatpush1.msra.mxu0 0.0
    %2154 = vmatprep.mubr.f32.mxu0 0.0
    %2155 = vmatmul.mubr.f32.gmra.mrb[0].mxu0 %v1875
    %v2156 = vpop.f32.mrb[0].mxu0
    %v2157 = vadd.f32 %v1872, %v2156
    %v2158 = vpop.f32.mrb[0].mxu0
    %v2159 = vadd.f32 %v1872, %v2158
    %2160 = vdwg.mxu0
    %2161 = vmatprep.subr.mxu0 %v1857
    %2162 = vmatpush1.msra.mxu0 %v1856
    %2163 = vmatprep.subr.mxu0 %v1867
    %2164 = vmatpush1.msra.mxu0 %v1866
    %2165 = vmatprep.subr.mxu0 0.0
    %2166 = vmatpush1.msra.mxu0 0.0
    %2167 = vmatprep.subr.mxu0 0.0
    %2168 = vmatpush1.msra.mxu0 0.0
    %2169 = vmatprep.subr.mxu0 0.0
    %2170 = vmatpush1.msra.mxu0 0.0
    %2171 = vmatprep.subr.mxu0 0.0
    %2172 = vmatpush1.msra.mxu0 0.0
    %2173 = vmatprep.subr.mxu0 0.0
    %2174 = vmatpush1.msra.mxu0 0.0
    %2175 = vmatprep.subr.mxu0 0.0
    %2176 = vmatpush1.msra.mxu0 0.0
    %2177 = vmatprep.subr.mxu0 0.0
    %2178 = vmatpush1.msra.mxu0 0.0
    %2179 = vmatprep.subr.mxu0 0.0
    %2180 = vmatpush1.msra.mxu0 0.0
    %2181 = vmatprep.subr.mxu0 0.0
    %2182 = vmatpush1.msra.mxu0 0.0
    %2183 = vmatprep.subr.mxu0 0.0
    %2184 = vmatpush1.msra.mxu0 0.0
    %2185 = vmatprep.subr.mxu0 0.0
    %2186 = vmatpush1.msra.mxu0 0.0
    %2187 = vmatprep.subr.mxu0 0.0
    %2188 = vmatpush1.msra.mxu0 0.0
    %2189 = vmatprep.subr.mxu0 0.0
    %2190 = vmatpush1.msra.mxu0 0.0
    %2191 = vmatprep.subr.mxu0 0.0
    %2192 = vmatpush1.msra.mxu0 0.0
    %2193 = vmatprep.subr.mxu0 0.0
    %2194 = vmatpush1.msra.mxu0 0.0
    %2195 = vmatprep.subr.mxu0 0.0
    %2196 = vmatpush1.msra.mxu0 0.0
    %2197 = vmatprep.subr.mxu0 0.0
    %2198 = vmatpush1.msra.mxu0 0.0
    %2199 = vmatprep.subr.mxu0 0.0
    %2200 = vmatpush1.msra.mxu0 0.0
    %2201 = vmatprep.subr.mxu0 0.0
    %2202 = vmatpush1.msra.mxu0 0.0
    %2203 = vmatprep.subr.mxu0 0.0
    %2204 = vmatpush1.msra.mxu0 0.0
    %2205 = vmatprep.subr.mxu0 0.0
    %2206 = vmatpush1.msra.mxu0 0.0
    %2207 = vmatprep.subr.mxu0 0.0
    %2208 = vmatpush1.msra.mxu0 0.0
    %2209 = vmatprep.subr.mxu0 0.0
    %2210 = vmatpush1.msra.mxu0 0.0
    %2211 = vmatprep.subr.mxu0 0.0
    %2212 = vmatpush1.msra.mxu0 0.0
    %2213 = vmatprep.subr.mxu0 0.0
    %2214 = vmatpush1.msra.mxu0 0.0
    %2215 = vmatprep.subr.mxu0 0.0
    %2216 = vmatpush1.msra.mxu0 0.0
    %2217 = vmatprep.subr.mxu0 0.0
    %2218 = vmatpush1.msra.mxu0 0.0
    %2219 = vmatprep.subr.mxu0 0.0
    %2220 = vmatpush1.msra.mxu0 0.0
    %2221 = vmatprep.subr.mxu0 0.0
    %2222 = vmatpush1.msra.mxu0 0.0
    %2223 = vmatprep.subr.mxu0 0.0
    %2224 = vmatpush1.msra.mxu0 0.0
    %2225 = vmatprep.mubr.f32.mxu0 0.0
    %2226 = vmatmul.mubr.f32.gmra.mrb[0].mxu0 %v1875
    %v2227 = vpop.f32.mrb[0].mxu0
    %v2228 = vadd.f32 %v1872, %v2227
    %v2229 = vpop.f32.mrb[0].mxu0
    %v2230 = vadd.f32 %v1872, %v2229
    %2231 = vdwg.mxu0
    %v2232 = vld [vmem:[#allocation7] sm:$0xff]
    %v2233 = vld [vmem:[#allocation7 + $0x8] sm:$0xff]
    %v2234 = vld [vmem:[#allocation7 + $0x10] sm:$0xff]
    %v2235 = vld [vmem:[#allocation7 + $0x18] sm:$0xff]
    %v2236 = vld [vmem:[#allocation7 + $0x20] sm:$0xff]
    %v2237 = vld [vmem:[#allocation7 + $0x28] sm:$0xff]
    %v2238 = vld [vmem:[#allocation7 + $0x30] sm:$0xff]
    %v2239 = vld [vmem:[#allocation7 + $0x38] sm:$0xff]
    %v2240 = vld [vmem:[#allocation7 + $0x40] sm:$0xff]
    %v2241 = vld [vmem:[#allocation7 + $0x48] sm:$0xff]
    %v2242 = vadd.f32 %v1944, %v2232
    %v2243 = vadd.f32 %v1946, %v2233
    %v2244 = vadd.f32 %v2015, %v2234
    %v2245 = vadd.f32 %v2017, %v2235
    %v2246 = vadd.f32 %v2086, %v2236
    %v2247 = vadd.f32 %v2088, %v2237
    %v2248 = vadd.f32 %v2157, %v2238
    %v2249 = vadd.f32 %v2159, %v2239
    %v2250 = vadd.f32 %v2228, %v2240
    %v2251 = vadd.f32 %v2230, %v2241
    %2252 = vst [vmem:[#allocation8] sm:$0xff] %v2242
    %2253 = vst [vmem:[#allocation8 + $0x8] sm:$0xff] %v2243
    %2254 = vst [vmem:[#allocation8 + $0x10] sm:$0xff] %v2244
    %2255 = vst [vmem:[#allocation8 + $0x18] sm:$0xff] %v2245
    %2256 = vst [vmem:[#allocation8 + $0x20] sm:$0xff] %v2246
    %2257 = vst [vmem:[#allocation8 + $0x28] sm:$0xff] %v2247
    %2258 = vst [vmem:[#allocation8 + $0x30] sm:$0xff] %v2248
    %2259 = vst [vmem:[#allocation8 + $0x38] sm:$0xff] %v2249
    %2260 = vst [vmem:[#allocation8 + $0x40] sm:$0xff] %v2250
    %2261 = vst [vmem:[#allocation8 + $0x48] sm:$0xff] %v2251
    // Predicated region
    $region26: #{tpu_custom_call.1} parent=1 // pred_check
      _
    $region27: #{tpu_custom_call.1} parent=1 // pred_check_branch
      %2263 = sbr.rel (0) target = $region29
    $region28: #{tpu_custom_call.1} parent=1 // pred_region
      %s2265 = ssub.s32 1280, 1280
      %2266 = vsyncadd [#allocation4], %s2265
      %s2268 = sshll.u32 [#allocation8], 4
      %s2269 = int_to_ptr.vmem [resolvable:$true] %s2268
      %2271 = dma.vmem_to_hbm [thread:$0]  %s2269, 1280, %s3, [#allocation4]
    $region29: #{tpu_custom_call.1} parent=1 // pred_fallthru
      _
    // Predicated region
    $region30: #{tpu_custom_call.1} parent=1 // pred_check
      _
    $region31: #{tpu_custom_call.1} parent=1 // pred_check_branch
      %2273 = sbr.rel (0) target = $region33
    $region32: #{tpu_custom_call.1} parent=1 // pred_region
      %2274 = dma.done [#allocation4], 1280
    $region33: #{tpu_custom_call.1} parent=1 // pred_fallthru
      _
    %2275 = vsyncpa [#allocation3], 1
    %2276 = vsyncpa [#allocation6], 1
    %2277 = vsyncpa [#allocation4], 1

</llo_original>
